<compile_context>
chip_gen: v5e
topology: v5e:2x2
jax: 0.10.0
libtpu: 0.0.40
codegen_flags: <defaults>
</compile_context>

<pallas_src>
import numpy as np
import jax
import jax.numpy as jnp
from jax import lax
from jax.experimental import pallas as pl
from jax.experimental.pallas import tpu as pltpu

# ---- hyperparameters (small, consistent with the module __init__) ----
EMB_SIZE = 50     # embedding_size
EMB_DIM = 32      # embedding_dimention
HID = 16          # hidden_dimention
FEAT = 8          # nnargs['feature_dimention']

_VMEM = pl.BlockSpec(memory_space=pltpu.MemorySpace.VMEM)


def _sigmoid(x):
    return 1.0 / (1.0 + jnp.exp(-x))


# ----------------------------- Pallas kernels -----------------------------

def bilstm_kernel(xg_ref, len_ref, whh_ref, outf_ref, outb_ref):
    """Fused bidirectional LSTM recurrence.

    xg_ref : [T, B, 8H] precomputed input-gate pre-activations (x @ W_ih + b) with
             the backward direction already time-reversed and columns permuted to
             the fused gate order [i_f, i_b, f_f, f_b, o_f, o_b, g_f, g_b].
    whh_ref: [2H, 8H] block-diagonal recurrent weight in the same column order;
             rows 0:H act on h_fwd, rows H:2H act on h_bwd.
    Emulates pack_padded_sequence by zeroing h/c on padded steps (so the backward
    direction starts fresh at position len-1 and padded outputs are zero).
    """
    T = xg_ref.shape[0]
    B = xg_ref.shape[1]
    H = HID
    lens = len_ref[...]                                       # [B, 1] int32
    col = lax.broadcasted_iota(jnp.int32, (1, 2 * H), 1)      # [1, 2H]
    whh = whh_ref[...]

    def step(t, carry):
        h, c = carry                                          # [B, 2H] each
        tr = T - 1 - t
        gates = xg_ref[t] + jnp.dot(h, whh, preferred_element_type=jnp.float32)  # [B, 8H]
        sg = _sigmoid(gates[:, 0:6 * H])                      # one contiguous sigmoid slab
        i = sg[:, 0:2 * H]
        f = sg[:, 2 * H:4 * H]
        o = sg[:, 4 * H:6 * H]
        g = jnp.tanh(gates[:, 6 * H:8 * H])
        c_new = f * c + i * g
        h_new = o * jnp.tanh(c_new)
        # forward half (cols < H) is valid while lens > t; backward half while lens > tr
        step_pos = jnp.where(col < H, t, tr)                  # [1, 2H]
        valid = lens > step_pos                               # [B, 2H] bool
        c_new = jnp.where(valid, c_new, 0.0)
        h_new = jnp.where(valid, h_new, 0.0)
        outf_ref[t] = h_new[:, 0:H]
        outb_ref[tr] = h_new[:, H:2 * H]
        return (h_new, c_new)

    h0 = jnp.zeros((B, 2 * H), jnp.float32)
    c0 = jnp.zeros((B, 2 * H), jnp.float32)
    lax.fori_loop(0, T, step, (h0, c0), unroll=True)


def score_kernel(zp_pre_ref, zp_post_ref,
                 start_ref, end_ref, width_ref, text_ref, mask_ref, dproj_ref,
                 me_row_ref, me_b_ref,
                 zp1_ref, zp1b_ref, zp2_ref, zp2b_ref,
                 zpx_ref, zpxb_ref,
                 np1_ref, np1b_ref, np2_ref, np2b_ref,
                 zps_ref, zpsb_ref, nps_ref, npsb_ref,
                 h1_ref, h1b_ref, h2row_ref, h2b_ref,
                 zp_s_ref, zp_x_ref, np_s_ref, pair_ref):
    """All scoring fused in one call.

    Produces: zp_score [n_zp,1], zp_x_score [n_zp,1], np_score [n_np,1] and the
    lane-dense pair-score grid [n_zp, n_np].  Concatenated representations
    ([pre|post] and [start|end|width|head]) are expressed as row-sliced blocks of
    the corresponding layer-1 weights, so nothing is concatenated in-kernel.
    """
    H = HID
    F = FEAT

    def dot(a, b):
        return jnp.dot(a, b, preferred_element_type=jnp.float32)

    zp_pre = zp_pre_ref[...]                                        # [n_zp, 2H]
    zp_post = zp_post_ref[...]                                      # [n_zp, 2H]

    # ---- zp_score (2-layer MLP on [pre|post]) and zp_x_score (linear) ----
    zp_h = jnp.tanh(dot(zp_pre, zp1_ref[0:2 * H, :])
                    + dot(zp_post, zp1_ref[2 * H:4 * H, :]) + zp1b_ref[...])
    zp_s_ref[...] = dot(zp_h, zp2_ref[...]) + zp2b_ref[...]
    zp_x_ref[...] = (dot(zp_pre, zpx_ref[0:2 * H, :])
                     + dot(zp_post, zpx_ref[2 * H:4 * H, :]) + zpxb_ref[...])

    # ---- mention-head attention (additive mask, EUP reciprocal) ----
    text = text_ref[...]                                            # [Nm, W, 2H]
    hs = jnp.sum(text * me_row_ref[...][None], axis=-1) + me_b_ref[...]   # [Nm, W]
    logits = hs + jnp.where(mask_ref[...] > 0, 0.0, -1e30)
    m = jnp.max(logits, axis=1, keepdims=True)
    e = jnp.exp(logits - m)
    attn = e * pl.reciprocal(jnp.sum(e, axis=1, keepdims=True), approx=True)
    head = jnp.sum(text * attn[:, :, None], axis=1)                 # [Nm, 2H]

    start = start_ref[...]
    end = end_ref[...]
    width = width_ref[...]

    # ---- np_score (row-blocked np_representation_layer_1) ----
    np_h = jnp.tanh(dot(start, np1_ref[0:2 * H, :])
                    + dot(end, np1_ref[2 * H:4 * H, :])
                    + dot(width, np1_ref[4 * H:4 * H + F, :])
                    + dot(head, np1_ref[4 * H + F:6 * H + F, :]) + np1b_ref[...])
    np_s_ref[...] = dot(np_h, np2_ref[...]) + np2b_ref[...]

    # ---- pair scores over the full (zp, np) grid ----
    # first-layer projections are O(n_zp + n_np); the quadratic part is only the
    # broadcast-add + the small per-pair hidden layers.
    zp_proj = (dot(zp_pre, zps_ref[0:2 * H, :])
               + dot(zp_post, zps_ref[2 * H:4 * H, :]) + zpsb_ref[...])       # [n_zp, 2H]
    np_proj = (dot(start, nps_ref[0:2 * H, :])
               + dot(end, nps_ref[2 * H:4 * H, :])
               + dot(width, nps_ref[4 * H:4 * H + F, :])
               + dot(head, nps_ref[4 * H + F:6 * H + F, :]) + npsb_ref[...])  # [n_np, 2H]
    hidden = jnp.tanh(zp_proj[:, None, :] + np_proj[None, :, :] + dproj_ref[...])  # [n_zp,n_np,2H]
    n_zp = zp_pre.shape[0]
    h1w_b = jnp.broadcast_to(h1_ref[...][None], (n_zp,) + h1_ref.shape)
    h2 = jnp.tanh(jnp.einsum('znd,zdk->znk', hidden, h1w_b,
                             preferred_element_type=jnp.float32) + h1b_ref[...])    # [n_zp,n_np,H]
    # width-1 output head as a lane reduction -> lane-dense [n_zp, n_np] grid
    pair_ref[...] = jnp.sum(h2 * h2row_ref[...][None], axis=-1) + h2b_ref[...]


# ----------------------------- wrappers -----------------------------

def _split_gates(w):
    """Split PyTorch-ordered gate columns (i, f, g, o), each of width HID."""
    return (w[..., 0:HID], w[..., HID:2 * HID],
            w[..., 2 * HID:3 * HID], w[..., 3 * HID:4 * HID])


def bilstm(params, word_emb_bte, lengths):
    """word_emb_bte: [B, T, E]. Returns (out_fwd, out_bwd), each [T, B, H]."""
    B, T, E = word_emb_bte.shape
    x = word_emb_bte.astype(jnp.float32)

    # hoisted input projections (one parallel matmul per direction, outside the loop)
    xf = jnp.einsum('bte,eg->btg', x, params['w_ih_f']) + params['b_f']   # [B,T,4H]
    xb = jnp.einsum('bte,eg->btg', x, params['w_ih_b']) + params['b_b']   # [B,T,4H]
    xb = xb[:, ::-1, :]                                                   # time-reverse bwd dir
    i_f, f_f, g_f, o_f = _split_gates(xf)
    i_b, f_b, g_b, o_b = _split_gates(xb)
    xg = jnp.concatenate([i_f, i_b, f_f, f_b, o_f, o_b, g_f, g_b], axis=-1)  # [B,T,8H]
    xg = jnp.transpose(xg, (1, 0, 2))                                        # [T,B,8H]

    # block-diagonal recurrent weight in the fused column order
    hi_f, hf_f, hg_f, ho_f = _split_gates(params['w_hh_f'])
    hi_b, hf_b, hg_b, ho_b = _split_gates(params['w_hh_b'])
    Z = jnp.zeros((HID, HID), jnp.float32)
    whh = jnp.concatenate([
        jnp.concatenate([hi_f, Z, hf_f, Z, ho_f, Z, hg_f, Z], axis=1),
        jnp.concatenate([Z, hi_b, Z, hf_b, Z, ho_b, Z, hg_b], axis=1)], axis=0)  # [2H,8H]

    lens = jnp.asarray(lengths, jnp.int32).reshape(B, 1)
    outf, outb = pl.pallas_call(
        bilstm_kernel,
        out_shape=(jax.ShapeDtypeStruct((T, B, HID), jnp.float32),
                   jax.ShapeDtypeStruct((T, B, HID), jnp.float32)),
        in_specs=[_VMEM] * 3,
        out_specs=(_VMEM, _VMEM),
    )(xg, lens, whh)
    return outf, outb


def pallas_scores(params, zp_pre_emb, zp_post_emb, start_emb, end_emb, width_emb,
                  text_emb, np_mask, dproj_grid):
    n_zp = zp_pre_emb.shape[0]
    n_np = start_emb.shape[0]
    me_row = jnp.transpose(params['me_w'])                         # [1, 2H]
    h2row = jnp.transpose(params['h2_w'])                          # [1, H]
    return pl.pallas_call(
        score_kernel,
        out_shape=(jax.ShapeDtypeStruct((n_zp, 1), jnp.float32),
                   jax.ShapeDtypeStruct((n_zp, 1), jnp.float32),
                   jax.ShapeDtypeStruct((n_np, 1), jnp.float32),
                   jax.ShapeDtypeStruct((n_zp, n_np), jnp.float32)),
        in_specs=[_VMEM] * 28,
        out_specs=(_VMEM,) * 4,
    )(zp_pre_emb, zp_post_emb, start_emb, end_emb, width_emb, text_emb, np_mask, dproj_grid,
      me_row, params['me_b'],
      params['zp1_w'], params['zp1_b'], params['zp2_w'], params['zp2_b'],
      params['zpx_w'], params['zpx_b'],
      params['np1_w'], params['np1_b'], params['np2_w'], params['np2_b'],
      params['zps_w'], params['zps_b'], params['nps_w'], params['nps_b'],
      params['h1_w'], params['h1_b'], h2row, params['h2_b'])


# ----------------------------- model glue -----------------------------

def init_params(key):
    def nrm(k, shape, scale=0.1):
        return scale * jax.random.normal(k, shape, dtype=jnp.float32)
    keys = jax.random.split(key, 32)
    npdim = 6 * HID + FEAT
    p = {}
    p['embedding'] = nrm(keys[0], (EMB_SIZE, EMB_DIM), 1.0)          # embedding_layer
    p['width_emb'] = nrm(keys[1], (10, FEAT))                        # mention_width_embeddings
    p['dist_emb'] = nrm(keys[2], (10, FEAT))                         # distance_embeddings
    # LSTM (PyTorch gate order i,f,g,o; weights stored transposed, biases fused b_ih+b_hh)
    p['w_ih_f'] = nrm(keys[3], (EMB_DIM, 4 * HID))
    p['w_hh_f'] = nrm(keys[4], (HID, 4 * HID))
    p['b_f'] = nrm(keys[5], (1, 4 * HID))
    p['w_ih_b'] = nrm(keys[6], (EMB_DIM, 4 * HID))
    p['w_hh_b'] = nrm(keys[7], (HID, 4 * HID))
    p['b_b'] = nrm(keys[8], (1, 4 * HID))
    p['zp1_w'] = nrm(keys[9], (4 * HID, 2 * HID)); p['zp1_b'] = nrm(keys[10], (1, 2 * HID))
    p['zp2_w'] = nrm(keys[11], (2 * HID, 1));      p['zp2_b'] = nrm(keys[12], (1, 1))
    p['me_w'] = nrm(keys[13], (2 * HID, 1));       p['me_b'] = nrm(keys[14], (1, 1))
    p['np1_w'] = nrm(keys[15], (npdim, 2 * HID));  p['np1_b'] = nrm(keys[16], (1, 2 * HID))
    p['np2_w'] = nrm(keys[17], (2 * HID, 1));      p['np2_b'] = nrm(keys[18], (1, 1))
    p['zps_w'] = nrm(keys[19], (4 * HID, 2 * HID)); p['zps_b'] = nrm(keys[20], (1, 2 * HID))
    p['nps_w'] = nrm(keys[21], (npdim, 2 * HID));   p['nps_b'] = nrm(keys[22], (1, 2 * HID))
    p['fs_w'] = nrm(keys[23], (FEAT, 2 * HID));     p['fs_b'] = nrm(keys[24], (1, 2 * HID))
    p['h1_w'] = nrm(keys[25], (2 * HID, HID));      p['h1_b'] = nrm(keys[26], (1, HID))
    p['h2_w'] = nrm(keys[27], (HID, 1));            p['h2_b'] = nrm(keys[28], (1, 1))
    p['zpx_w'] = nrm(keys[29], (4 * HID, 1));       p['zpx_b'] = nrm(keys[30], (1, 1))
    return p


def _device_forward_impl(params, sen_vec, lens, tok_idx, zp_pre, zp_post,
                         np_start, np_end, np_indecs, np_mask,
                         dist_grid_idx, np_reindex):
    B, T = sen_vec.shape
    word_embedding = jnp.take(params['embedding'], sen_vec, axis=0)      # [B, T, E]
    outf, outb = bilstm(params, word_embedding, lens)                    # each [T, B, H]

    # torch.masked_select(...).view(2H,-1).T == gather valid (b,t) rows in b-major
    # order; tok_idx already encodes the [T, B] layout (t*B + b), so no transpose.
    lstm_flat = jnp.concatenate([outf, outb], axis=-1).reshape(T * B, 2 * HID)
    sent = jnp.take(lstm_flat, tok_idx, axis=0)                          # [Ntok, 2H]
    sentence_embedding = jnp.concatenate(
        [sent, jnp.zeros((1, 2 * HID), jnp.float32)], axis=0)

    zp_pre_emb = jnp.take(sentence_embedding, zp_pre, axis=0)            # [n_zp, 2H]
    zp_post_emb = jnp.take(sentence_embedding, zp_post, axis=0)          # [n_zp, 2H]

    start_emb = jnp.take(sentence_embedding, np_start, axis=0)           # [n_np, 2H]
    end_emb = jnp.take(sentence_embedding, np_end, axis=0)               # [n_np, 2H]
    # TODO(synk): PyTorch nn.Embedding would error for width_index >= 10; jnp.take clamps.
    width_emb = jnp.take(params['width_emb'], np_end - np_start, axis=0)  # [n_np, F]
    text_emb = jnp.take(sentence_embedding, np_indecs, axis=0)           # [n_np, W, 2H]

    # distance features: project the 10-row table once, gather the projected rows.
    dist_proj_table = (jnp.dot(params['dist_emb'], params['fs_w'])
                       + params['fs_b'])                                 # [10, 2H]
    dproj_grid = jnp.take(dist_proj_table, dist_grid_idx, axis=0)        # [n_zp, n_np, 2H]

    zp_score, zp_x_score, np_score, pair_grid = pallas_scores(
        params, zp_pre_emb, zp_post_emb, start_emb, end_emb, width_emb,
        text_emb, np_mask, dproj_grid)

    pair_score = pair_grid.reshape(-1, 1)                                # zp-major pair order
    np_pair_score = jnp.take(np_score, np_reindex, axis=0)
    return np_pair_score, pair_score, zp_score, np_score, zp_x_score


_device_forward = jax.jit(_device_forward_impl)


def forward(params, doc, np_lamda=0.2, zp_lamda=0.1):
    mask = np.asarray(doc['mask'], dtype=bool)
    B = mask.shape[0]
    rows_b, cols_t = np.nonzero(mask)                     # b-major enumeration of valid tokens
    tok_idx = (cols_t.astype(np.int32) * B + rows_b.astype(np.int32))  # indices into [T,B] layout

    zp_pre_np = np.asarray(doc['zp_pre_index'], np.int32)
    np_start_np = np.asarray(doc['np_index_start'], np.int32)
    n_zp = int(zp_pre_np.shape[0])
    n_np = int(np_start_np.shape[0])

    # TODO(synk): opt.get_candis_by_scores / opt.get_zps_by_scores / opt.get_pairs are
    # external non-tensor selection heuristics; deterministic stand-in pairs every zp
    # with every np and derives a clipped distance bucket.
    zp_reindex = np.repeat(np.arange(n_zp), n_np).astype(np.int32)
    np_reindex = np.tile(np.arange(n_np), n_zp).astype(np.int32)
    start, end = 0, len(zp_reindex)
    distance_feature = np.clip(
        np.abs(zp_pre_np[zp_reindex] - np_start_np[np_reindex]), 0, 9).astype(np.int32)

    (np_pair_score, pair_score, zp_score, np_score, zp_x_score) = _device_forward(
        params,
        jnp.asarray(doc['vec'], jnp.int32),
        jnp.asarray(doc['sentence_len'], jnp.int32),
        jnp.asarray(tok_idx),
        jnp.asarray(doc['zp_pre_index'], jnp.int32),
        jnp.asarray(doc['zp_post_index'], jnp.int32),
        jnp.asarray(doc['np_index_start'], jnp.int32),
        jnp.asarray(doc['np_index_end'], jnp.int32),
        jnp.asarray(doc['np_indecs'], jnp.int32),
        jnp.asarray(doc['np_mask'], jnp.float32),
        jnp.asarray(distance_feature.reshape(n_zp, n_np)),
        jnp.asarray(np_reindex))

    return (start, end, zp_reindex, np_reindex, np_pair_score, pair_score,
            zp_score, np_score, zp_x_score)


# ----------------------------- demo -----------------------------

if __name__ == "__main__":
    key = jax.random.PRNGKey(0)
    pkey, dkey = jax.random.split(key)
    params = init_params(pkey)

    B, T = 2, 8
    lengths = np.array([8, 6], dtype=np.int32)
    vec = np.asarray(jax.random.randint(dkey, (B, T), 0, EMB_SIZE, dtype=jnp.int32))
    mask = np.zeros((B, T), dtype=bool)
    for b in range(B):
        mask[b, :lengths[b]] = True

    # Ntok = 14 valid tokens, sentence_embedding has 15 rows (extra zero row = index 14)
    doc = dict(
        vec=vec, mask=mask, sentence_len=lengths,
        zp_pre_index=np.array([0, 3, 7], dtype=np.int32),
        zp_post_index=np.array([1, 4, 8], dtype=np.int32),
        np_index_start=np.array([0, 2, 5, 9], dtype=np.int32),
        np_index_end=np.array([1, 3, 7, 9], dtype=np.int32),
        np_indecs=np.array([[0, 1, 14], [2, 3, 14], [5, 6, 7], [9, 14, 14]], dtype=np.int32),
        np_mask=np.array([[1, 1, 0], [1, 1, 0], [1, 1, 1], [1, 0, 0]], dtype=np.float32),
    )

    outs = forward(params, doc)
    (start, end, zp_reindex, np_reindex, np_pair_score, pair_score,
     zp_score, np_score, zp_x_score) = outs

    for a in (np_pair_score, pair_score, zp_score, np_score, zp_x_score):
        jax.block_until_ready(a)
        assert np.all(np.isfinite(np.asarray(a)))
    assert np.asarray(pair_score).shape == (len(zp_reindex), 1)
    assert np.asarray(zp_score).shape == (3, 1)
    assert np.asarray(np_score).shape == (4, 1)

    print("KERNEL_OK")
</pallas_src>

<mosaic_0001>
module attributes {stable_mosaic.version = 11 : i64} {
  func.func @bilstm_kernel(%arg0: memref<8x2x128xf32, #tpu.memory_space<vmem>>, %arg1: memref<2x1xi32, #tpu.memory_space<vmem>>, %arg2: memref<32x128xf32, #tpu.memory_space<vmem>>, %arg3: memref<8x2x16xf32, #tpu.memory_space<vmem>>, %arg4: memref<8x2x16xf32, #tpu.memory_space<vmem>>) attributes {dimension_semantics = [], scalar_prefetch = 0 : i64, scratch_operands = 0 : i64, tpu.core_type = #tpu.core_type<tc>} {
    %c0 = arith.constant 0 : index
    %c0_0 = arith.constant 0 : index
    %0 = vector.load %arg1[%c0, %c0_0] : memref<2x1xi32, #tpu.memory_space<vmem>>, vector<2x1xi32>
    %1 = tpu.iota {dimensions = array<i32: 1>} : vector<1x32xi32>
    %c0_1 = arith.constant 0 : index
    %c0_2 = arith.constant 0 : index
    %2 = vector.load %arg2[%c0_1, %c0_2] : memref<32x128xf32, #tpu.memory_space<vmem>>, vector<32x128xf32>
    %cst = arith.constant 0.000000e+00 : f32
    %3 = vector.broadcast %cst : f32 to vector<2x32xf32>
    %cst_3 = arith.constant 0.000000e+00 : f32
    %4 = vector.broadcast %cst_3 : f32 to vector<2x32xf32>
    %c0_i32 = arith.constant 0 : i32
    %c7_i32 = arith.constant 7 : i32
    %5 = arith.subi %c7_i32, %c0_i32 : i32
    %6 = arith.index_cast %c0_i32 : i32 to index
    %c0_4 = arith.constant 0 : index
    %c0_5 = arith.constant 0 : index
    %7 = vector.load %arg0[%6, %c0_4, %c0_5] : memref<8x2x128xf32, #tpu.memory_space<vmem>>, vector<1x2x128xf32>
    %8 = vector.shape_cast %7 : vector<1x2x128xf32> to vector<2x128xf32>
    %cst_6 = arith.constant dense<0.000000e+00> : vector<2x128xf32>
    %9 = tpu.matmul %3, %2, %cst_6 {dimension_numbers = #tpu.dot_dimension_numbers<[1], [0], [0], [1], [0, 0, 1, 1], [], []>} : vector<2x32xf32>, vector<32x128xf32>, vector<2x128xf32> -> vector<2x128xf32>
    %10 = arith.addf %8, %9 : vector<2x128xf32>
    %11 = vector.extract_strided_slice %10 {offsets = [0, 0], sizes = [2, 96], strides = [1, 1]} : vector<2x128xf32> to vector<2x96xf32>
    %cst_7 = arith.constant 0.000000e+00 : f32
    %12 = vector.broadcast %cst_7 : f32 to vector<2x96xf32>
    %13 = arith.subf %12, %11 : vector<2x96xf32>
    %14 = math.exp %13 : vector<2x96xf32>
    %cst_8 = arith.constant 1.000000e+00 : f32
    %15 = vector.broadcast %cst_8 : f32 to vector<2x96xf32>
    %16 = arith.addf %15, %14 : vector<2x96xf32>
    %cst_9 = arith.constant 1.000000e+00 : f32
    %17 = vector.broadcast %cst_9 : f32 to vector<2x96xf32>
    %18 = arith.divf %17, %16 : vector<2x96xf32>
    %19 = vector.extract_strided_slice %18 {offsets = [0, 0], sizes = [2, 32], strides = [1, 1]} : vector<2x96xf32> to vector<2x32xf32>
    %20 = vector.extract_strided_slice %18 {offsets = [0, 32], sizes = [2, 32], strides = [1, 1]} : vector<2x96xf32> to vector<2x32xf32>
    %21 = vector.extract_strided_slice %18 {offsets = [0, 64], sizes = [2, 32], strides = [1, 1]} : vector<2x96xf32> to vector<2x32xf32>
    %22 = vector.extract_strided_slice %10 {offsets = [0, 96], sizes = [2, 32], strides = [1, 1]} : vector<2x128xf32> to vector<2x32xf32>
    %23 = math.tanh %22 : vector<2x32xf32>
    %24 = arith.mulf %20, %4 : vector<2x32xf32>
    %25 = arith.mulf %19, %23 : vector<2x32xf32>
    %26 = arith.addf %24, %25 : vector<2x32xf32>
    %27 = math.tanh %26 : vector<2x32xf32>
    %28 = arith.mulf %21, %27 : vector<2x32xf32>
    %c16_i32 = arith.constant 16 : i32
    %29 = vector.broadcast %c16_i32 : i32 to vector<1x32xi32>
    %30 = arith.cmpi slt, %1, %29 : vector<1x32xi32>
    %31 = vector.broadcast %c0_i32 : i32 to vector<1x32xi32>
    %32 = vector.broadcast %5 : i32 to vector<1x32xi32>
    %33 = arith.select %30, %31, %32 : vector<1x32xi1>, vector<1x32xi32>
    %34 = vector.broadcast %0 : vector<2x1xi32> to vector<2x32xi32>
    %35 = vector.broadcast %33 : vector<1x32xi32> to vector<2x32xi32>
    %36 = arith.cmpi sgt, %34, %35 : vector<2x32xi32>
    %cst_10 = arith.constant 0.000000e+00 : f32
    %37 = vector.broadcast %cst_10 : f32 to vector<2x32xf32>
    %38 = arith.select %36, %26, %37 : vector<2x32xi1>, vector<2x32xf32>
    %cst_11 = arith.constant 0.000000e+00 : f32
    %39 = vector.broadcast %cst_11 : f32 to vector<2x32xf32>
    %40 = arith.select %36, %28, %39 : vector<2x32xi1>, vector<2x32xf32>
    %41 = vector.extract_strided_slice %40 {offsets = [0, 0], sizes = [2, 16], strides = [1, 1]} : vector<2x32xf32> to vector<2x16xf32>
    %42 = arith.index_cast %c0_i32 : i32 to index
    %c0_12 = arith.constant 0 : index
    %c0_13 = arith.constant 0 : index
    %43 = vector.load %arg3[%42, %c0_12, %c0_13] : memref<8x2x16xf32, #tpu.memory_space<vmem>>, vector<1x2x16xf32>
    %44 = vector.shape_cast %43 : vector<1x2x16xf32> to vector<2x16xf32>
    %45 = vector.shape_cast %41 : vector<2x16xf32> to vector<1x2x16xf32>
    tpu.vector_store %arg3[%42, %c0_12, %c0_13], %45 {strides = array<i32>} : memref<8x2x16xf32, #tpu.memory_space<vmem>>, vector<1x2x16xf32>,
    %46 = vector.extract_strided_slice %40 {offsets = [0, 16], sizes = [2, 16], strides = [1, 1]} : vector<2x32xf32> to vector<2x16xf32>
    %47 = arith.index_cast %5 : i32 to index
    %c0_14 = arith.constant 0 : index
    %c0_15 = arith.constant 0 : index
    %48 = vector.load %arg4[%47, %c0_14, %c0_15] : memref<8x2x16xf32, #tpu.memory_space<vmem>>, vector<1x2x16xf32>
    %49 = vector.shape_cast %48 : vector<1x2x16xf32> to vector<2x16xf32>
    %50 = vector.shape_cast %46 : vector<2x16xf32> to vector<1x2x16xf32>
    tpu.vector_store %arg4[%47, %c0_14, %c0_15], %50 {strides = array<i32>} : memref<8x2x16xf32, #tpu.memory_space<vmem>>, vector<1x2x16xf32>,
    %c1_i32 = arith.constant 1 : i32
    %c7_i32_16 = arith.constant 7 : i32
    %51 = arith.subi %c7_i32_16, %c1_i32 : i32
    %52 = arith.index_cast %c1_i32 : i32 to index
    %c0_17 = arith.constant 0 : index
    %c0_18 = arith.constant 0 : index
    %53 = vector.load %arg0[%52, %c0_17, %c0_18] : memref<8x2x128xf32, #tpu.memory_space<vmem>>, vector<1x2x128xf32>
    %54 = vector.shape_cast %53 : vector<1x2x128xf32> to vector<2x128xf32>
    %cst_19 = arith.constant dense<0.000000e+00> : vector<2x128xf32>
    %55 = tpu.matmul %40, %2, %cst_19 {dimension_numbers = #tpu.dot_dimension_numbers<[1], [0], [0], [1], [0, 0, 1, 1], [], []>} : vector<2x32xf32>, vector<32x128xf32>, vector<2x128xf32> -> vector<2x128xf32>
    %56 = arith.addf %54, %55 : vector<2x128xf32>
    %57 = vector.extract_strided_slice %56 {offsets = [0, 0], sizes = [2, 96], strides = [1, 1]} : vector<2x128xf32> to vector<2x96xf32>
    %cst_20 = arith.constant 0.000000e+00 : f32
    %58 = vector.broadcast %cst_20 : f32 to vector<2x96xf32>
    %59 = arith.subf %58, %57 : vector<2x96xf32>
    %60 = math.exp %59 : vector<2x96xf32>
    %cst_21 = arith.constant 1.000000e+00 : f32
    %61 = vector.broadcast %cst_21 : f32 to vector<2x96xf32>
    %62 = arith.addf %61, %60 : vector<2x96xf32>
    %cst_22 = arith.constant 1.000000e+00 : f32
    %63 = vector.broadcast %cst_22 : f32 to vector<2x96xf32>
    %64 = arith.divf %63, %62 : vector<2x96xf32>
    %65 = vector.extract_strided_slice %64 {offsets = [0, 0], sizes = [2, 32], strides = [1, 1]} : vector<2x96xf32> to vector<2x32xf32>
    %66 = vector.extract_strided_slice %64 {offsets = [0, 32], sizes = [2, 32], strides = [1, 1]} : vector<2x96xf32> to vector<2x32xf32>
    %67 = vector.extract_strided_slice %64 {offsets = [0, 64], sizes = [2, 32], strides = [1, 1]} : vector<2x96xf32> to vector<2x32xf32>
    %68 = vector.extract_strided_slice %56 {offsets = [0, 96], sizes = [2, 32], strides = [1, 1]} : vector<2x128xf32> to vector<2x32xf32>
    %69 = math.tanh %68 : vector<2x32xf32>
    %70 = arith.mulf %66, %38 : vector<2x32xf32>
    %71 = arith.mulf %65, %69 : vector<2x32xf32>
    %72 = arith.addf %70, %71 : vector<2x32xf32>
    %73 = math.tanh %72 : vector<2x32xf32>
    %74 = arith.mulf %67, %73 : vector<2x32xf32>
    %c16_i32_23 = arith.constant 16 : i32
    %75 = vector.broadcast %c16_i32_23 : i32 to vector<1x32xi32>
    %76 = arith.cmpi slt, %1, %75 : vector<1x32xi32>
    %77 = vector.broadcast %c1_i32 : i32 to vector<1x32xi32>
    %78 = vector.broadcast %51 : i32 to vector<1x32xi32>
    %79 = arith.select %76, %77, %78 : vector<1x32xi1>, vector<1x32xi32>
    %80 = vector.broadcast %0 : vector<2x1xi32> to vector<2x32xi32>
    %81 = vector.broadcast %79 : vector<1x32xi32> to vector<2x32xi32>
    %82 = arith.cmpi sgt, %80, %81 : vector<2x32xi32>
    %cst_24 = arith.constant 0.000000e+00 : f32
    %83 = vector.broadcast %cst_24 : f32 to vector<2x32xf32>
    %84 = arith.select %82, %72, %83 : vector<2x32xi1>, vector<2x32xf32>
    %cst_25 = arith.constant 0.000000e+00 : f32
    %85 = vector.broadcast %cst_25 : f32 to vector<2x32xf32>
    %86 = arith.select %82, %74, %85 : vector<2x32xi1>, vector<2x32xf32>
    %87 = vector.extract_strided_slice %86 {offsets = [0, 0], sizes = [2, 16], strides = [1, 1]} : vector<2x32xf32> to vector<2x16xf32>
    %88 = arith.index_cast %c1_i32 : i32 to index
    %c0_26 = arith.constant 0 : index
    %c0_27 = arith.constant 0 : index
    %89 = vector.load %arg3[%88, %c0_26, %c0_27] : memref<8x2x16xf32, #tpu.memory_space<vmem>>, vector<1x2x16xf32>
    %90 = vector.shape_cast %89 : vector<1x2x16xf32> to vector<2x16xf32>
    %91 = vector.shape_cast %87 : vector<2x16xf32> to vector<1x2x16xf32>
    tpu.vector_store %arg3[%88, %c0_26, %c0_27], %91 {strides = array<i32>} : memref<8x2x16xf32, #tpu.memory_space<vmem>>, vector<1x2x16xf32>,
    %92 = vector.extract_strided_slice %86 {offsets = [0, 16], sizes = [2, 16], strides = [1, 1]} : vector<2x32xf32> to vector<2x16xf32>
    %93 = arith.index_cast %51 : i32 to index
    %c0_28 = arith.constant 0 : index
    %c0_29 = arith.constant 0 : index
    %94 = vector.load %arg4[%93, %c0_28, %c0_29] : memref<8x2x16xf32, #tpu.memory_space<vmem>>, vector<1x2x16xf32>
    %95 = vector.shape_cast %94 : vector<1x2x16xf32> to vector<2x16xf32>
    %96 = vector.shape_cast %92 : vector<2x16xf32> to vector<1x2x16xf32>
    tpu.vector_store %arg4[%93, %c0_28, %c0_29], %96 {strides = array<i32>} : memref<8x2x16xf32, #tpu.memory_space<vmem>>, vector<1x2x16xf32>,
    %c2_i32 = arith.constant 2 : i32
    %c7_i32_30 = arith.constant 7 : i32
    %97 = arith.subi %c7_i32_30, %c2_i32 : i32
    %98 = arith.index_cast %c2_i32 : i32 to index
    %c0_31 = arith.constant 0 : index
    %c0_32 = arith.constant 0 : index
    %99 = vector.load %arg0[%98, %c0_31, %c0_32] : memref<8x2x128xf32, #tpu.memory_space<vmem>>, vector<1x2x128xf32>
    %100 = vector.shape_cast %99 : vector<1x2x128xf32> to vector<2x128xf32>
    %cst_33 = arith.constant dense<0.000000e+00> : vector<2x128xf32>
    %101 = tpu.matmul %86, %2, %cst_33 {dimension_numbers = #tpu.dot_dimension_numbers<[1], [0], [0], [1], [0, 0, 1, 1], [], []>} : vector<2x32xf32>, vector<32x128xf32>, vector<2x128xf32> -> vector<2x128xf32>
    %102 = arith.addf %100, %101 : vector<2x128xf32>
    %103 = vector.extract_strided_slice %102 {offsets = [0, 0], sizes = [2, 96], strides = [1, 1]} : vector<2x128xf32> to vector<2x96xf32>
    %cst_34 = arith.constant 0.000000e+00 : f32
    %104 = vector.broadcast %cst_34 : f32 to vector<2x96xf32>
    %105 = arith.subf %104, %103 : vector<2x96xf32>
    %106 = math.exp %105 : vector<2x96xf32>
    %cst_35 = arith.constant 1.000000e+00 : f32
    %107 = vector.broadcast %cst_35 : f32 to vector<2x96xf32>
    %108 = arith.addf %107, %106 : vector<2x96xf32>
    %cst_36 = arith.constant 1.000000e+00 : f32
    %109 = vector.broadcast %cst_36 : f32 to vector<2x96xf32>
    %110 = arith.divf %109, %108 : vector<2x96xf32>
    %111 = vector.extract_strided_slice %110 {offsets = [0, 0], sizes = [2, 32], strides = [1, 1]} : vector<2x96xf32> to vector<2x32xf32>
    %112 = vector.extract_strided_slice %110 {offsets = [0, 32], sizes = [2, 32], strides = [1, 1]} : vector<2x96xf32> to vector<2x32xf32>
    %113 = vector.extract_strided_slice %110 {offsets = [0, 64], sizes = [2, 32], strides = [1, 1]} : vector<2x96xf32> to vector<2x32xf32>
    %114 = vector.extract_strided_slice %102 {offsets = [0, 96], sizes = [2, 32], strides = [1, 1]} : vector<2x128xf32> to vector<2x32xf32>
    %115 = math.tanh %114 : vector<2x32xf32>
    %116 = arith.mulf %112, %84 : vector<2x32xf32>
    %117 = arith.mulf %111, %115 : vector<2x32xf32>
    %118 = arith.addf %116, %117 : vector<2x32xf32>
    %119 = math.tanh %118 : vector<2x32xf32>
    %120 = arith.mulf %113, %119 : vector<2x32xf32>
    %c16_i32_37 = arith.constant 16 : i32
    %121 = vector.broadcast %c16_i32_37 : i32 to vector<1x32xi32>
    %122 = arith.cmpi slt, %1, %121 : vector<1x32xi32>
    %123 = vector.broadcast %c2_i32 : i32 to vector<1x32xi32>
    %124 = vector.broadcast %97 : i32 to vector<1x32xi32>
    %125 = arith.select %122, %123, %124 : vector<1x32xi1>, vector<1x32xi32>
    %126 = vector.broadcast %0 : vector<2x1xi32> to vector<2x32xi32>
    %127 = vector.broadcast %125 : vector<1x32xi32> to vector<2x32xi32>
    %128 = arith.cmpi sgt, %126, %127 : vector<2x32xi32>
    %cst_38 = arith.constant 0.000000e+00 : f32
    %129 = vector.broadcast %cst_38 : f32 to vector<2x32xf32>
    %130 = arith.select %128, %118, %129 : vector<2x32xi1>, vector<2x32xf32>
    %cst_39 = arith.constant 0.000000e+00 : f32
    %131 = vector.broadcast %cst_39 : f32 to vector<2x32xf32>
    %132 = arith.select %128, %120, %131 : vector<2x32xi1>, vector<2x32xf32>
    %133 = vector.extract_strided_slice %132 {offsets = [0, 0], sizes = [2, 16], strides = [1, 1]} : vector<2x32xf32> to vector<2x16xf32>
    %134 = arith.index_cast %c2_i32 : i32 to index
    %c0_40 = arith.constant 0 : index
    %c0_41 = arith.constant 0 : index
    %135 = vector.load %arg3[%134, %c0_40, %c0_41] : memref<8x2x16xf32, #tpu.memory_space<vmem>>, vector<1x2x16xf32>
    %136 = vector.shape_cast %135 : vector<1x2x16xf32> to vector<2x16xf32>
    %137 = vector.shape_cast %133 : vector<2x16xf32> to vector<1x2x16xf32>
    tpu.vector_store %arg3[%134, %c0_40, %c0_41], %137 {strides = array<i32>} : memref<8x2x16xf32, #tpu.memory_space<vmem>>, vector<1x2x16xf32>,
    %138 = vector.extract_strided_slice %132 {offsets = [0, 16], sizes = [2, 16], strides = [1, 1]} : vector<2x32xf32> to vector<2x16xf32>
    %139 = arith.index_cast %97 : i32 to index
    %c0_42 = arith.constant 0 : index
    %c0_43 = arith.constant 0 : index
    %140 = vector.load %arg4[%139, %c0_42, %c0_43] : memref<8x2x16xf32, #tpu.memory_space<vmem>>, vector<1x2x16xf32>
    %141 = vector.shape_cast %140 : vector<1x2x16xf32> to vector<2x16xf32>
    %142 = vector.shape_cast %138 : vector<2x16xf32> to vector<1x2x16xf32>
    tpu.vector_store %arg4[%139, %c0_42, %c0_43], %142 {strides = array<i32>} : memref<8x2x16xf32, #tpu.memory_space<vmem>>, vector<1x2x16xf32>,
    %c3_i32 = arith.constant 3 : i32
    %c7_i32_44 = arith.constant 7 : i32
    %143 = arith.subi %c7_i32_44, %c3_i32 : i32
    %144 = arith.index_cast %c3_i32 : i32 to index
    %c0_45 = arith.constant 0 : index
    %c0_46 = arith.constant 0 : index
    %145 = vector.load %arg0[%144, %c0_45, %c0_46] : memref<8x2x128xf32, #tpu.memory_space<vmem>>, vector<1x2x128xf32>
    %146 = vector.shape_cast %145 : vector<1x2x128xf32> to vector<2x128xf32>
    %cst_47 = arith.constant dense<0.000000e+00> : vector<2x128xf32>
    %147 = tpu.matmul %132, %2, %cst_47 {dimension_numbers = #tpu.dot_dimension_numbers<[1], [0], [0], [1], [0, 0, 1, 1], [], []>} : vector<2x32xf32>, vector<32x128xf32>, vector<2x128xf32> -> vector<2x128xf32>
    %148 = arith.addf %146, %147 : vector<2x128xf32>
    %149 = vector.extract_strided_slice %148 {offsets = [0, 0], sizes = [2, 96], strides = [1, 1]} : vector<2x128xf32> to vector<2x96xf32>
    %cst_48 = arith.constant 0.000000e+00 : f32
    %150 = vector.broadcast %cst_48 : f32 to vector<2x96xf32>
    %151 = arith.subf %150, %149 : vector<2x96xf32>
    %152 = math.exp %151 : vector<2x96xf32>
    %cst_49 = arith.constant 1.000000e+00 : f32
    %153 = vector.broadcast %cst_49 : f32 to vector<2x96xf32>
    %154 = arith.addf %153, %152 : vector<2x96xf32>
    %cst_50 = arith.constant 1.000000e+00 : f32
    %155 = vector.broadcast %cst_50 : f32 to vector<2x96xf32>
    %156 = arith.divf %155, %154 : vector<2x96xf32>
    %157 = vector.extract_strided_slice %156 {offsets = [0, 0], sizes = [2, 32], strides = [1, 1]} : vector<2x96xf32> to vector<2x32xf32>
    %158 = vector.extract_strided_slice %156 {offsets = [0, 32], sizes = [2, 32], strides = [1, 1]} : vector<2x96xf32> to vector<2x32xf32>
    %159 = vector.extract_strided_slice %156 {offsets = [0, 64], sizes = [2, 32], strides = [1, 1]} : vector<2x96xf32> to vector<2x32xf32>
    %160 = vector.extract_strided_slice %148 {offsets = [0, 96], sizes = [2, 32], strides = [1, 1]} : vector<2x128xf32> to vector<2x32xf32>
    %161 = math.tanh %160 : vector<2x32xf32>
    %162 = arith.mulf %158, %130 : vector<2x32xf32>
    %163 = arith.mulf %157, %161 : vector<2x32xf32>
    %164 = arith.addf %162, %163 : vector<2x32xf32>
    %165 = math.tanh %164 : vector<2x32xf32>
    %166 = arith.mulf %159, %165 : vector<2x32xf32>
    %c16_i32_51 = arith.constant 16 : i32
    %167 = vector.broadcast %c16_i32_51 : i32 to vector<1x32xi32>
    %168 = arith.cmpi slt, %1, %167 : vector<1x32xi32>
    %169 = vector.broadcast %c3_i32 : i32 to vector<1x32xi32>
    %170 = vector.broadcast %143 : i32 to vector<1x32xi32>
    %171 = arith.select %168, %169, %170 : vector<1x32xi1>, vector<1x32xi32>
    %172 = vector.broadcast %0 : vector<2x1xi32> to vector<2x32xi32>
    %173 = vector.broadcast %171 : vector<1x32xi32> to vector<2x32xi32>
    %174 = arith.cmpi sgt, %172, %173 : vector<2x32xi32>
    %cst_52 = arith.constant 0.000000e+00 : f32
    %175 = vector.broadcast %cst_52 : f32 to vector<2x32xf32>
    %176 = arith.select %174, %164, %175 : vector<2x32xi1>, vector<2x32xf32>
    %cst_53 = arith.constant 0.000000e+00 : f32
    %177 = vector.broadcast %cst_53 : f32 to vector<2x32xf32>
    %178 = arith.select %174, %166, %177 : vector<2x32xi1>, vector<2x32xf32>
    %179 = vector.extract_strided_slice %178 {offsets = [0, 0], sizes = [2, 16], strides = [1, 1]} : vector<2x32xf32> to vector<2x16xf32>
    %180 = arith.index_cast %c3_i32 : i32 to index
    %c0_54 = arith.constant 0 : index
    %c0_55 = arith.constant 0 : index
    %181 = vector.load %arg3[%180, %c0_54, %c0_55] : memref<8x2x16xf32, #tpu.memory_space<vmem>>, vector<1x2x16xf32>
    %182 = vector.shape_cast %181 : vector<1x2x16xf32> to vector<2x16xf32>
    %183 = vector.shape_cast %179 : vector<2x16xf32> to vector<1x2x16xf32>
    tpu.vector_store %arg3[%180, %c0_54, %c0_55], %183 {strides = array<i32>} : memref<8x2x16xf32, #tpu.memory_space<vmem>>, vector<1x2x16xf32>,
    %184 = vector.extract_strided_slice %178 {offsets = [0, 16], sizes = [2, 16], strides = [1, 1]} : vector<2x32xf32> to vector<2x16xf32>
    %185 = arith.index_cast %143 : i32 to index
    %c0_56 = arith.constant 0 : index
    %c0_57 = arith.constant 0 : index
    %186 = vector.load %arg4[%185, %c0_56, %c0_57] : memref<8x2x16xf32, #tpu.memory_space<vmem>>, vector<1x2x16xf32>
    %187 = vector.shape_cast %186 : vector<1x2x16xf32> to vector<2x16xf32>
    %188 = vector.shape_cast %184 : vector<2x16xf32> to vector<1x2x16xf32>
    tpu.vector_store %arg4[%185, %c0_56, %c0_57], %188 {strides = array<i32>} : memref<8x2x16xf32, #tpu.memory_space<vmem>>, vector<1x2x16xf32>,
    %c4_i32 = arith.constant 4 : i32
    %c7_i32_58 = arith.constant 7 : i32
    %189 = arith.subi %c7_i32_58, %c4_i32 : i32
    %190 = arith.index_cast %c4_i32 : i32 to index
    %c0_59 = arith.constant 0 : index
    %c0_60 = arith.constant 0 : index
    %191 = vector.load %arg0[%190, %c0_59, %c0_60] : memref<8x2x128xf32, #tpu.memory_space<vmem>>, vector<1x2x128xf32>
    %192 = vector.shape_cast %191 : vector<1x2x128xf32> to vector<2x128xf32>
    %cst_61 = arith.constant dense<0.000000e+00> : vector<2x128xf32>
    %193 = tpu.matmul %178, %2, %cst_61 {dimension_numbers = #tpu.dot_dimension_numbers<[1], [0], [0], [1], [0, 0, 1, 1], [], []>} : vector<2x32xf32>, vector<32x128xf32>, vector<2x128xf32> -> vector<2x128xf32>
    %194 = arith.addf %192, %193 : vector<2x128xf32>
    %195 = vector.extract_strided_slice %194 {offsets = [0, 0], sizes = [2, 96], strides = [1, 1]} : vector<2x128xf32> to vector<2x96xf32>
    %cst_62 = arith.constant 0.000000e+00 : f32
    %196 = vector.broadcast %cst_62 : f32 to vector<2x96xf32>
    %197 = arith.subf %196, %195 : vector<2x96xf32>
    %198 = math.exp %197 : vector<2x96xf32>
    %cst_63 = arith.constant 1.000000e+00 : f32
    %199 = vector.broadcast %cst_63 : f32 to vector<2x96xf32>
    %200 = arith.addf %199, %198 : vector<2x96xf32>
    %cst_64 = arith.constant 1.000000e+00 : f32
    %201 = vector.broadcast %cst_64 : f32 to vector<2x96xf32>
    %202 = arith.divf %201, %200 : vector<2x96xf32>
    %203 = vector.extract_strided_slice %202 {offsets = [0, 0], sizes = [2, 32], strides = [1, 1]} : vector<2x96xf32> to vector<2x32xf32>
    %204 = vector.extract_strided_slice %202 {offsets = [0, 32], sizes = [2, 32], strides = [1, 1]} : vector<2x96xf32> to vector<2x32xf32>
    %205 = vector.extract_strided_slice %202 {offsets = [0, 64], sizes = [2, 32], strides = [1, 1]} : vector<2x96xf32> to vector<2x32xf32>
    %206 = vector.extract_strided_slice %194 {offsets = [0, 96], sizes = [2, 32], strides = [1, 1]} : vector<2x128xf32> to vector<2x32xf32>
    %207 = math.tanh %206 : vector<2x32xf32>
    %208 = arith.mulf %204, %176 : vector<2x32xf32>
    %209 = arith.mulf %203, %207 : vector<2x32xf32>
    %210 = arith.addf %208, %209 : vector<2x32xf32>
    %211 = math.tanh %210 : vector<2x32xf32>
    %212 = arith.mulf %205, %211 : vector<2x32xf32>
    %c16_i32_65 = arith.constant 16 : i32
    %213 = vector.broadcast %c16_i32_65 : i32 to vector<1x32xi32>
    %214 = arith.cmpi slt, %1, %213 : vector<1x32xi32>
    %215 = vector.broadcast %c4_i32 : i32 to vector<1x32xi32>
    %216 = vector.broadcast %189 : i32 to vector<1x32xi32>
    %217 = arith.select %214, %215, %216 : vector<1x32xi1>, vector<1x32xi32>
    %218 = vector.broadcast %0 : vector<2x1xi32> to vector<2x32xi32>
    %219 = vector.broadcast %217 : vector<1x32xi32> to vector<2x32xi32>
    %220 = arith.cmpi sgt, %218, %219 : vector<2x32xi32>
    %cst_66 = arith.constant 0.000000e+00 : f32
    %221 = vector.broadcast %cst_66 : f32 to vector<2x32xf32>
    %222 = arith.select %220, %210, %221 : vector<2x32xi1>, vector<2x32xf32>
    %cst_67 = arith.constant 0.000000e+00 : f32
    %223 = vector.broadcast %cst_67 : f32 to vector<2x32xf32>
    %224 = arith.select %220, %212, %223 : vector<2x32xi1>, vector<2x32xf32>
    %225 = vector.extract_strided_slice %224 {offsets = [0, 0], sizes = [2, 16], strides = [1, 1]} : vector<2x32xf32> to vector<2x16xf32>
    %226 = arith.index_cast %c4_i32 : i32 to index
    %c0_68 = arith.constant 0 : index
    %c0_69 = arith.constant 0 : index
    %227 = vector.load %arg3[%226, %c0_68, %c0_69] : memref<8x2x16xf32, #tpu.memory_space<vmem>>, vector<1x2x16xf32>
    %228 = vector.shape_cast %227 : vector<1x2x16xf32> to vector<2x16xf32>
    %229 = vector.shape_cast %225 : vector<2x16xf32> to vector<1x2x16xf32>
    tpu.vector_store %arg3[%226, %c0_68, %c0_69], %229 {strides = array<i32>} : memref<8x2x16xf32, #tpu.memory_space<vmem>>, vector<1x2x16xf32>,
    %230 = vector.extract_strided_slice %224 {offsets = [0, 16], sizes = [2, 16], strides = [1, 1]} : vector<2x32xf32> to vector<2x16xf32>
    %231 = arith.index_cast %189 : i32 to index
    %c0_70 = arith.constant 0 : index
    %c0_71 = arith.constant 0 : index
    %232 = vector.load %arg4[%231, %c0_70, %c0_71] : memref<8x2x16xf32, #tpu.memory_space<vmem>>, vector<1x2x16xf32>
    %233 = vector.shape_cast %232 : vector<1x2x16xf32> to vector<2x16xf32>
    %234 = vector.shape_cast %230 : vector<2x16xf32> to vector<1x2x16xf32>
    tpu.vector_store %arg4[%231, %c0_70, %c0_71], %234 {strides = array<i32>} : memref<8x2x16xf32, #tpu.memory_space<vmem>>, vector<1x2x16xf32>,
    %c5_i32 = arith.constant 5 : i32
    %c7_i32_72 = arith.constant 7 : i32
    %235 = arith.subi %c7_i32_72, %c5_i32 : i32
    %236 = arith.index_cast %c5_i32 : i32 to index
    %c0_73 = arith.constant 0 : index
    %c0_74 = arith.constant 0 : index
    %237 = vector.load %arg0[%236, %c0_73, %c0_74] : memref<8x2x128xf32, #tpu.memory_space<vmem>>, vector<1x2x128xf32>
    %238 = vector.shape_cast %237 : vector<1x2x128xf32> to vector<2x128xf32>
    %cst_75 = arith.constant dense<0.000000e+00> : vector<2x128xf32>
    %239 = tpu.matmul %224, %2, %cst_75 {dimension_numbers = #tpu.dot_dimension_numbers<[1], [0], [0], [1], [0, 0, 1, 1], [], []>} : vector<2x32xf32>, vector<32x128xf32>, vector<2x128xf32> -> vector<2x128xf32>
    %240 = arith.addf %238, %239 : vector<2x128xf32>
    %241 = vector.extract_strided_slice %240 {offsets = [0, 0], sizes = [2, 96], strides = [1, 1]} : vector<2x128xf32> to vector<2x96xf32>
    %cst_76 = arith.constant 0.000000e+00 : f32
    %242 = vector.broadcast %cst_76 : f32 to vector<2x96xf32>
    %243 = arith.subf %242, %241 : vector<2x96xf32>
    %244 = math.exp %243 : vector<2x96xf32>
    %cst_77 = arith.constant 1.000000e+00 : f32
    %245 = vector.broadcast %cst_77 : f32 to vector<2x96xf32>
    %246 = arith.addf %245, %244 : vector<2x96xf32>
    %cst_78 = arith.constant 1.000000e+00 : f32
    %247 = vector.broadcast %cst_78 : f32 to vector<2x96xf32>
    %248 = arith.divf %247, %246 : vector<2x96xf32>
    %249 = vector.extract_strided_slice %248 {offsets = [0, 0], sizes = [2, 32], strides = [1, 1]} : vector<2x96xf32> to vector<2x32xf32>
    %250 = vector.extract_strided_slice %248 {offsets = [0, 32], sizes = [2, 32], strides = [1, 1]} : vector<2x96xf32> to vector<2x32xf32>
    %251 = vector.extract_strided_slice %248 {offsets = [0, 64], sizes = [2, 32], strides = [1, 1]} : vector<2x96xf32> to vector<2x32xf32>
    %252 = vector.extract_strided_slice %240 {offsets = [0, 96], sizes = [2, 32], strides = [1, 1]} : vector<2x128xf32> to vector<2x32xf32>
    %253 = math.tanh %252 : vector<2x32xf32>
    %254 = arith.mulf %250, %222 : vector<2x32xf32>
    %255 = arith.mulf %249, %253 : vector<2x32xf32>
    %256 = arith.addf %254, %255 : vector<2x32xf32>
    %257 = math.tanh %256 : vector<2x32xf32>
    %258 = arith.mulf %251, %257 : vector<2x32xf32>
    %c16_i32_79 = arith.constant 16 : i32
    %259 = vector.broadcast %c16_i32_79 : i32 to vector<1x32xi32>
    %260 = arith.cmpi slt, %1, %259 : vector<1x32xi32>
    %261 = vector.broadcast %c5_i32 : i32 to vector<1x32xi32>
    %262 = vector.broadcast %235 : i32 to vector<1x32xi32>
    %263 = arith.select %260, %261, %262 : vector<1x32xi1>, vector<1x32xi32>
    %264 = vector.broadcast %0 : vector<2x1xi32> to vector<2x32xi32>
    %265 = vector.broadcast %263 : vector<1x32xi32> to vector<2x32xi32>
    %266 = arith.cmpi sgt, %264, %265 : vector<2x32xi32>
    %cst_80 = arith.constant 0.000000e+00 : f32
    %267 = vector.broadcast %cst_80 : f32 to vector<2x32xf32>
    %268 = arith.select %266, %256, %267 : vector<2x32xi1>, vector<2x32xf32>
    %cst_81 = arith.constant 0.000000e+00 : f32
    %269 = vector.broadcast %cst_81 : f32 to vector<2x32xf32>
    %270 = arith.select %266, %258, %269 : vector<2x32xi1>, vector<2x32xf32>
    %271 = vector.extract_strided_slice %270 {offsets = [0, 0], sizes = [2, 16], strides = [1, 1]} : vector<2x32xf32> to vector<2x16xf32>
    %272 = arith.index_cast %c5_i32 : i32 to index
    %c0_82 = arith.constant 0 : index
    %c0_83 = arith.constant 0 : index
    %273 = vector.load %arg3[%272, %c0_82, %c0_83] : memref<8x2x16xf32, #tpu.memory_space<vmem>>, vector<1x2x16xf32>
    %274 = vector.shape_cast %273 : vector<1x2x16xf32> to vector<2x16xf32>
    %275 = vector.shape_cast %271 : vector<2x16xf32> to vector<1x2x16xf32>
    tpu.vector_store %arg3[%272, %c0_82, %c0_83], %275 {strides = array<i32>} : memref<8x2x16xf32, #tpu.memory_space<vmem>>, vector<1x2x16xf32>,
    %276 = vector.extract_strided_slice %270 {offsets = [0, 16], sizes = [2, 16], strides = [1, 1]} : vector<2x32xf32> to vector<2x16xf32>
    %277 = arith.index_cast %235 : i32 to index
    %c0_84 = arith.constant 0 : index
    %c0_85 = arith.constant 0 : index
    %278 = vector.load %arg4[%277, %c0_84, %c0_85] : memref<8x2x16xf32, #tpu.memory_space<vmem>>, vector<1x2x16xf32>
    %279 = vector.shape_cast %278 : vector<1x2x16xf32> to vector<2x16xf32>
    %280 = vector.shape_cast %276 : vector<2x16xf32> to vector<1x2x16xf32>
    tpu.vector_store %arg4[%277, %c0_84, %c0_85], %280 {strides = array<i32>} : memref<8x2x16xf32, #tpu.memory_space<vmem>>, vector<1x2x16xf32>,
    %c6_i32 = arith.constant 6 : i32
    %c7_i32_86 = arith.constant 7 : i32
    %281 = arith.subi %c7_i32_86, %c6_i32 : i32
    %282 = arith.index_cast %c6_i32 : i32 to index
    %c0_87 = arith.constant 0 : index
    %c0_88 = arith.constant 0 : index
    %283 = vector.load %arg0[%282, %c0_87, %c0_88] : memref<8x2x128xf32, #tpu.memory_space<vmem>>, vector<1x2x128xf32>
    %284 = vector.shape_cast %283 : vector<1x2x128xf32> to vector<2x128xf32>
    %cst_89 = arith.constant dense<0.000000e+00> : vector<2x128xf32>
    %285 = tpu.matmul %270, %2, %cst_89 {dimension_numbers = #tpu.dot_dimension_numbers<[1], [0], [0], [1], [0, 0, 1, 1], [], []>} : vector<2x32xf32>, vector<32x128xf32>, vector<2x128xf32> -> vector<2x128xf32>
    %286 = arith.addf %284, %285 : vector<2x128xf32>
    %287 = vector.extract_strided_slice %286 {offsets = [0, 0], sizes = [2, 96], strides = [1, 1]} : vector<2x128xf32> to vector<2x96xf32>
    %cst_90 = arith.constant 0.000000e+00 : f32
    %288 = vector.broadcast %cst_90 : f32 to vector<2x96xf32>
    %289 = arith.subf %288, %287 : vector<2x96xf32>
    %290 = math.exp %289 : vector<2x96xf32>
    %cst_91 = arith.constant 1.000000e+00 : f32
    %291 = vector.broadcast %cst_91 : f32 to vector<2x96xf32>
    %292 = arith.addf %291, %290 : vector<2x96xf32>
    %cst_92 = arith.constant 1.000000e+00 : f32
    %293 = vector.broadcast %cst_92 : f32 to vector<2x96xf32>
    %294 = arith.divf %293, %292 : vector<2x96xf32>
    %295 = vector.extract_strided_slice %294 {offsets = [0, 0], sizes = [2, 32], strides = [1, 1]} : vector<2x96xf32> to vector<2x32xf32>
    %296 = vector.extract_strided_slice %294 {offsets = [0, 32], sizes = [2, 32], strides = [1, 1]} : vector<2x96xf32> to vector<2x32xf32>
    %297 = vector.extract_strided_slice %294 {offsets = [0, 64], sizes = [2, 32], strides = [1, 1]} : vector<2x96xf32> to vector<2x32xf32>
    %298 = vector.extract_strided_slice %286 {offsets = [0, 96], sizes = [2, 32], strides = [1, 1]} : vector<2x128xf32> to vector<2x32xf32>
    %299 = math.tanh %298 : vector<2x32xf32>
    %300 = arith.mulf %296, %268 : vector<2x32xf32>
    %301 = arith.mulf %295, %299 : vector<2x32xf32>
    %302 = arith.addf %300, %301 : vector<2x32xf32>
    %303 = math.tanh %302 : vector<2x32xf32>
    %304 = arith.mulf %297, %303 : vector<2x32xf32>
    %c16_i32_93 = arith.constant 16 : i32
    %305 = vector.broadcast %c16_i32_93 : i32 to vector<1x32xi32>
    %306 = arith.cmpi slt, %1, %305 : vector<1x32xi32>
    %307 = vector.broadcast %c6_i32 : i32 to vector<1x32xi32>
    %308 = vector.broadcast %281 : i32 to vector<1x32xi32>
    %309 = arith.select %306, %307, %308 : vector<1x32xi1>, vector<1x32xi32>
    %310 = vector.broadcast %0 : vector<2x1xi32> to vector<2x32xi32>
    %311 = vector.broadcast %309 : vector<1x32xi32> to vector<2x32xi32>
    %312 = arith.cmpi sgt, %310, %311 : vector<2x32xi32>
    %cst_94 = arith.constant 0.000000e+00 : f32
    %313 = vector.broadcast %cst_94 : f32 to vector<2x32xf32>
    %314 = arith.select %312, %302, %313 : vector<2x32xi1>, vector<2x32xf32>
    %cst_95 = arith.constant 0.000000e+00 : f32
    %315 = vector.broadcast %cst_95 : f32 to vector<2x32xf32>
    %316 = arith.select %312, %304, %315 : vector<2x32xi1>, vector<2x32xf32>
    %317 = vector.extract_strided_slice %316 {offsets = [0, 0], sizes = [2, 16], strides = [1, 1]} : vector<2x32xf32> to vector<2x16xf32>
    %318 = arith.index_cast %c6_i32 : i32 to index
    %c0_96 = arith.constant 0 : index
    %c0_97 = arith.constant 0 : index
    %319 = vector.load %arg3[%318, %c0_96, %c0_97] : memref<8x2x16xf32, #tpu.memory_space<vmem>>, vector<1x2x16xf32>
    %320 = vector.shape_cast %319 : vector<1x2x16xf32> to vector<2x16xf32>
    %321 = vector.shape_cast %317 : vector<2x16xf32> to vector<1x2x16xf32>
    tpu.vector_store %arg3[%318, %c0_96, %c0_97], %321 {strides = array<i32>} : memref<8x2x16xf32, #tpu.memory_space<vmem>>, vector<1x2x16xf32>,
    %322 = vector.extract_strided_slice %316 {offsets = [0, 16], sizes = [2, 16], strides = [1, 1]} : vector<2x32xf32> to vector<2x16xf32>
    %323 = arith.index_cast %281 : i32 to index
    %c0_98 = arith.constant 0 : index
    %c0_99 = arith.constant 0 : index
    %324 = vector.load %arg4[%323, %c0_98, %c0_99] : memref<8x2x16xf32, #tpu.memory_space<vmem>>, vector<1x2x16xf32>
    %325 = vector.shape_cast %324 : vector<1x2x16xf32> to vector<2x16xf32>
    %326 = vector.shape_cast %322 : vector<2x16xf32> to vector<1x2x16xf32>
    tpu.vector_store %arg4[%323, %c0_98, %c0_99], %326 {strides = array<i32>} : memref<8x2x16xf32, #tpu.memory_space<vmem>>, vector<1x2x16xf32>,
    %c7_i32_100 = arith.constant 7 : i32
    %c7_i32_101 = arith.constant 7 : i32
    %327 = arith.subi %c7_i32_101, %c7_i32_100 : i32
    %328 = arith.index_cast %c7_i32_100 : i32 to index
    %c0_102 = arith.constant 0 : index
    %c0_103 = arith.constant 0 : index
    %329 = vector.load %arg0[%328, %c0_102, %c0_103] : memref<8x2x128xf32, #tpu.memory_space<vmem>>, vector<1x2x128xf32>
    %330 = vector.shape_cast %329 : vector<1x2x128xf32> to vector<2x128xf32>
    %cst_104 = arith.constant dense<0.000000e+00> : vector<2x128xf32>
    %331 = tpu.matmul %316, %2, %cst_104 {dimension_numbers = #tpu.dot_dimension_numbers<[1], [0], [0], [1], [0, 0, 1, 1], [], []>} : vector<2x32xf32>, vector<32x128xf32>, vector<2x128xf32> -> vector<2x128xf32>
    %332 = arith.addf %330, %331 : vector<2x128xf32>
    %333 = vector.extract_strided_slice %332 {offsets = [0, 0], sizes = [2, 96], strides = [1, 1]} : vector<2x128xf32> to vector<2x96xf32>
    %cst_105 = arith.constant 0.000000e+00 : f32
    %334 = vector.broadcast %cst_105 : f32 to vector<2x96xf32>
    %335 = arith.subf %334, %333 : vector<2x96xf32>
    %336 = math.exp %335 : vector<2x96xf32>
    %cst_106 = arith.constant 1.000000e+00 : f32
    %337 = vector.broadcast %cst_106 : f32 to vector<2x96xf32>
    %338 = arith.addf %337, %336 : vector<2x96xf32>
    %cst_107 = arith.constant 1.000000e+00 : f32
    %339 = vector.broadcast %cst_107 : f32 to vector<2x96xf32>
    %340 = arith.divf %339, %338 : vector<2x96xf32>
    %341 = vector.extract_strided_slice %340 {offsets = [0, 0], sizes = [2, 32], strides = [1, 1]} : vector<2x96xf32> to vector<2x32xf32>
    %342 = vector.extract_strided_slice %340 {offsets = [0, 32], sizes = [2, 32], strides = [1, 1]} : vector<2x96xf32> to vector<2x32xf32>
    %343 = vector.extract_strided_slice %340 {offsets = [0, 64], sizes = [2, 32], strides = [1, 1]} : vector<2x96xf32> to vector<2x32xf32>
    %344 = vector.extract_strided_slice %332 {offsets = [0, 96], sizes = [2, 32], strides = [1, 1]} : vector<2x128xf32> to vector<2x32xf32>
    %345 = math.tanh %344 : vector<2x32xf32>
    %346 = arith.mulf %342, %314 : vector<2x32xf32>
    %347 = arith.mulf %341, %345 : vector<2x32xf32>
    %348 = arith.addf %346, %347 : vector<2x32xf32>
    %349 = math.tanh %348 : vector<2x32xf32>
    %350 = arith.mulf %343, %349 : vector<2x32xf32>
    %c16_i32_108 = arith.constant 16 : i32
    %351 = vector.broadcast %c16_i32_108 : i32 to vector<1x32xi32>
    %352 = arith.cmpi slt, %1, %351 : vector<1x32xi32>
    %353 = vector.broadcast %c7_i32_100 : i32 to vector<1x32xi32>
    %354 = vector.broadcast %327 : i32 to vector<1x32xi32>
    %355 = arith.select %352, %353, %354 : vector<1x32xi1>, vector<1x32xi32>
    %356 = vector.broadcast %0 : vector<2x1xi32> to vector<2x32xi32>
    %357 = vector.broadcast %355 : vector<1x32xi32> to vector<2x32xi32>
    %358 = arith.cmpi sgt, %356, %357 : vector<2x32xi32>
    %cst_109 = arith.constant 0.000000e+00 : f32
    %359 = vector.broadcast %cst_109 : f32 to vector<2x32xf32>
    %360 = arith.select %358, %348, %359 : vector<2x32xi1>, vector<2x32xf32>
    %cst_110 = arith.constant 0.000000e+00 : f32
    %361 = vector.broadcast %cst_110 : f32 to vector<2x32xf32>
    %362 = arith.select %358, %350, %361 : vector<2x32xi1>, vector<2x32xf32>
    %363 = vector.extract_strided_slice %362 {offsets = [0, 0], sizes = [2, 16], strides = [1, 1]} : vector<2x32xf32> to vector<2x16xf32>
    %364 = arith.index_cast %c7_i32_100 : i32 to index
    %c0_111 = arith.constant 0 : index
    %c0_112 = arith.constant 0 : index
    %365 = vector.load %arg3[%364, %c0_111, %c0_112] : memref<8x2x16xf32, #tpu.memory_space<vmem>>, vector<1x2x16xf32>
    %366 = vector.shape_cast %365 : vector<1x2x16xf32> to vector<2x16xf32>
    %367 = vector.shape_cast %363 : vector<2x16xf32> to vector<1x2x16xf32>
    tpu.vector_store %arg3[%364, %c0_111, %c0_112], %367 {strides = array<i32>} : memref<8x2x16xf32, #tpu.memory_space<vmem>>, vector<1x2x16xf32>,
    %368 = vector.extract_strided_slice %362 {offsets = [0, 16], sizes = [2, 16], strides = [1, 1]} : vector<2x32xf32> to vector<2x16xf32>
    %369 = arith.index_cast %327 : i32 to index
    %c0_113 = arith.constant 0 : index
    %c0_114 = arith.constant 0 : index
    %370 = vector.load %arg4[%369, %c0_113, %c0_114] : memref<8x2x16xf32, #tpu.memory_space<vmem>>, vector<1x2x16xf32>
    %371 = vector.shape_cast %370 : vector<1x2x16xf32> to vector<2x16xf32>
    %372 = vector.shape_cast %368 : vector<2x16xf32> to vector<1x2x16xf32>
    tpu.vector_store %arg4[%369, %c0_113, %c0_114], %372 {strides = array<i32>} : memref<8x2x16xf32, #tpu.memory_space<vmem>>, vector<1x2x16xf32>,
    %c8_i32 = arith.constant 8 : i32
    return
  }
}

module attributes {stable_mosaic.version = 11 : i64} {
  func.func @score_kernel(%arg0: memref<3x32xf32, #tpu.memory_space<vmem>>, %arg1: memref<3x32xf32, #tpu.memory_space<vmem>>, %arg2: memref<4x32xf32, #tpu.memory_space<vmem>>, %arg3: memref<4x32xf32, #tpu.memory_space<vmem>>, %arg4: memref<4x8xf32, #tpu.memory_space<vmem>>, %arg5: memref<4x3x32xf32, #tpu.memory_space<vmem>>, %arg6: memref<4x3xf32, #tpu.memory_space<vmem>>, %arg7: memref<3x4x32xf32, #tpu.memory_space<vmem>>, %arg8: memref<1x32xf32, #tpu.memory_space<vmem>>, %arg9: memref<1x1xf32, #tpu.memory_space<vmem>>, %arg10: memref<64x32xf32, #tpu.memory_space<vmem>>, %arg11: memref<1x32xf32, #tpu.memory_space<vmem>>, %arg12: memref<32x1xf32, #tpu.memory_space<vmem>>, %arg13: memref<1x1xf32, #tpu.memory_space<vmem>>, %arg14: memref<64x1xf32, #tpu.memory_space<vmem>>, %arg15: memref<1x1xf32, #tpu.memory_space<vmem>>, %arg16: memref<104x32xf32, #tpu.memory_space<vmem>>, %arg17: memref<1x32xf32, #tpu.memory_space<vmem>>, %arg18: memref<32x1xf32, #tpu.memory_space<vmem>>, %arg19: memref<1x1xf32, #tpu.memory_space<vmem>>, %arg20: memref<64x32xf32, #tpu.memory_space<vmem>>, %arg21: memref<1x32xf32, #tpu.memory_space<vmem>>, %arg22: memref<104x32xf32, #tpu.memory_space<vmem>>, %arg23: memref<1x32xf32, #tpu.memory_space<vmem>>, %arg24: memref<32x16xf32, #tpu.memory_space<vmem>>, %arg25: memref<1x16xf32, #tpu.memory_space<vmem>>, %arg26: memref<1x16xf32, #tpu.memory_space<vmem>>, %arg27: memref<1x1xf32, #tpu.memory_space<vmem>>, %arg28: memref<3x1xf32, #tpu.memory_space<vmem>>, %arg29: memref<3x1xf32, #tpu.memory_space<vmem>>, %arg30: memref<4x1xf32, #tpu.memory_space<vmem>>, %arg31: memref<3x4xf32, #tpu.memory_space<vmem>>) attributes {dimension_semantics = [], scalar_prefetch = 0 : i64, scratch_operands = 0 : i64, tpu.core_type = #tpu.core_type<tc>} {
    %c0 = arith.constant 0 : index
    %c0_0 = arith.constant 0 : index
    %0 = vector.load %arg0[%c0, %c0_0] : memref<3x32xf32, #tpu.memory_space<vmem>>, vector<3x32xf32>
    %c0_1 = arith.constant 0 : index
    %c0_2 = arith.constant 0 : index
    %1 = vector.load %arg1[%c0_1, %c0_2] : memref<3x32xf32, #tpu.memory_space<vmem>>, vector<3x32xf32>
    %c0_3 = arith.constant 0 : index
    %c0_4 = arith.constant 0 : index
    %2 = vector.load %arg10[%c0_3, %c0_4] : memref<64x32xf32, #tpu.memory_space<vmem>>, vector<32x32xf32>
    %cst = arith.constant dense<0.000000e+00> : vector<3x32xf32>
    %3 = tpu.matmul %0, %2, %cst {dimension_numbers = #tpu.dot_dimension_numbers<[1], [0], [0], [1], [0, 0, 1, 1], [], []>} : vector<3x32xf32>, vector<32x32xf32>, vector<3x32xf32> -> vector<3x32xf32>
    %c32 = arith.constant 32 : index
    %c0_5 = arith.constant 0 : index
    %4 = vector.load %arg10[%c32, %c0_5] : memref<64x32xf32, #tpu.memory_space<vmem>>, vector<32x32xf32>
    %cst_6 = arith.constant dense<0.000000e+00> : vector<3x32xf32>
    %5 = tpu.matmul %1, %4, %cst_6 {dimension_numbers = #tpu.dot_dimension_numbers<[1], [0], [0], [1], [0, 0, 1, 1], [], []>} : vector<3x32xf32>, vector<32x32xf32>, vector<3x32xf32> -> vector<3x32xf32>
    %6 = arith.addf %3, %5 : vector<3x32xf32>
    %c0_7 = arith.constant 0 : index
    %c0_8 = arith.constant 0 : index
    %7 = vector.load %arg11[%c0_7, %c0_8] : memref<1x32xf32, #tpu.memory_space<vmem>>, vector<1x32xf32>
    %8 = vector.broadcast %7 : vector<1x32xf32> to vector<3x32xf32>
    %9 = arith.addf %6, %8 : vector<3x32xf32>
    %10 = math.tanh %9 : vector<3x32xf32>
    %c0_9 = arith.constant 0 : index
    %c0_10 = arith.constant 0 : index
    %11 = vector.load %arg12[%c0_9, %c0_10] : memref<32x1xf32, #tpu.memory_space<vmem>>, vector<32x1xf32>
    %cst_11 = arith.constant dense<0.000000e+00> : vector<3x1xf32>
    %12 = tpu.matmul %10, %11, %cst_11 {dimension_numbers = #tpu.dot_dimension_numbers<[1], [0], [0], [1], [0, 0, 1, 1], [], []>} : vector<3x32xf32>, vector<32x1xf32>, vector<3x1xf32> -> vector<3x1xf32>
    %c0_12 = arith.constant 0 : index
    %c0_13 = arith.constant 0 : index
    %13 = vector.load %arg13[%c0_12, %c0_13] : memref<1x1xf32, #tpu.memory_space<vmem>>, vector<1x1xf32>
    %14 = vector.broadcast %13 : vector<1x1xf32> to vector<3x1xf32>
    %15 = arith.addf %12, %14 : vector<3x1xf32>
    %c0_14 = arith.constant 0 : index
    %c0_15 = arith.constant 0 : index
    %16 = vector.load %arg28[%c0_14, %c0_15] : memref<3x1xf32, #tpu.memory_space<vmem>>, vector<3x1xf32>
    tpu.vector_store %arg28[%c0_14, %c0_15], %15 {strides = array<i32>} : memref<3x1xf32, #tpu.memory_space<vmem>>, vector<3x1xf32>,
    %c0_16 = arith.constant 0 : index
    %c0_17 = arith.constant 0 : index
    %17 = vector.load %arg14[%c0_16, %c0_17] : memref<64x1xf32, #tpu.memory_space<vmem>>, vector<32x1xf32>
    %cst_18 = arith.constant dense<0.000000e+00> : vector<3x1xf32>
    %18 = tpu.matmul %0, %17, %cst_18 {dimension_numbers = #tpu.dot_dimension_numbers<[1], [0], [0], [1], [0, 0, 1, 1], [], []>} : vector<3x32xf32>, vector<32x1xf32>, vector<3x1xf32> -> vector<3x1xf32>
    %c32_19 = arith.constant 32 : index
    %c0_20 = arith.constant 0 : index
    %19 = vector.load %arg14[%c32_19, %c0_20] : memref<64x1xf32, #tpu.memory_space<vmem>>, vector<32x1xf32>
    %cst_21 = arith.constant dense<0.000000e+00> : vector<3x1xf32>
    %20 = tpu.matmul %1, %19, %cst_21 {dimension_numbers = #tpu.dot_dimension_numbers<[1], [0], [0], [1], [0, 0, 1, 1], [], []>} : vector<3x32xf32>, vector<32x1xf32>, vector<3x1xf32> -> vector<3x1xf32>
    %21 = arith.addf %18, %20 : vector<3x1xf32>
    %c0_22 = arith.constant 0 : index
    %c0_23 = arith.constant 0 : index
    %22 = vector.load %arg15[%c0_22, %c0_23] : memref<1x1xf32, #tpu.memory_space<vmem>>, vector<1x1xf32>
    %23 = vector.broadcast %22 : vector<1x1xf32> to vector<3x1xf32>
    %24 = arith.addf %21, %23 : vector<3x1xf32>
    %c0_24 = arith.constant 0 : index
    %c0_25 = arith.constant 0 : index
    %25 = vector.load %arg29[%c0_24, %c0_25] : memref<3x1xf32, #tpu.memory_space<vmem>>, vector<3x1xf32>
    tpu.vector_store %arg29[%c0_24, %c0_25], %24 {strides = array<i32>} : memref<3x1xf32, #tpu.memory_space<vmem>>, vector<3x1xf32>,
    %c0_26 = arith.constant 0 : index
    %c0_27 = arith.constant 0 : index
    %c0_28 = arith.constant 0 : index
    %26 = vector.load %arg5[%c0_26, %c0_27, %c0_28] : memref<4x3x32xf32, #tpu.memory_space<vmem>>, vector<4x3x32xf32>
    %c0_29 = arith.constant 0 : index
    %c0_30 = arith.constant 0 : index
    %27 = vector.load %arg8[%c0_29, %c0_30] : memref<1x32xf32, #tpu.memory_space<vmem>>, vector<1x32xf32>
    %28 = vector.shape_cast %27 : vector<1x32xf32> to vector<1x1x32xf32>
    %29 = vector.broadcast %28 : vector<1x1x32xf32> to vector<4x3x32xf32>
    %30 = arith.mulf %26, %29 : vector<4x3x32xf32>
    %cst_31 = arith.constant dense<0.000000e+00> : vector<4x3xf32>
    %31 = vector.multi_reduction <add>, %30, %cst_31 [2] : vector<4x3x32xf32> to vector<4x3xf32>
    %c0_32 = arith.constant 0 : index
    %c0_33 = arith.constant 0 : index
    %32 = vector.load %arg9[%c0_32, %c0_33] : memref<1x1xf32, #tpu.memory_space<vmem>>, vector<1x1xf32>
    %33 = vector.broadcast %32 : vector<1x1xf32> to vector<4x3xf32>
    %34 = arith.addf %31, %33 : vector<4x3xf32>
    %c0_34 = arith.constant 0 : index
    %c0_35 = arith.constant 0 : index
    %35 = vector.load %arg6[%c0_34, %c0_35] : memref<4x3xf32, #tpu.memory_space<vmem>>, vector<4x3xf32>
    %cst_36 = arith.constant 0.000000e+00 : f32
    %36 = vector.broadcast %cst_36 : f32 to vector<4x3xf32>
    %37 = arith.cmpf ogt, %35, %36 : vector<4x3xf32>
    %cst_37 = arith.constant 0.000000e+00 : f32
    %cst_38 = arith.constant -1.000000e+30 : f32
    %38 = vector.broadcast %cst_37 : f32 to vector<4x3xf32>
    %39 = vector.broadcast %cst_38 : f32 to vector<4x3xf32>
    %40 = arith.select %37, %38, %39 : vector<4x3xi1>, vector<4x3xf32>
    %41 = arith.addf %34, %40 : vector<4x3xf32>
    %cst_39 = arith.constant dense<0xFF800000> : vector<4xf32>
    %42 = vector.multi_reduction <maximumf>, %41, %cst_39 [1] : vector<4x3xf32> to vector<4xf32>
    %43 = vector.shape_cast %42 : vector<4xf32> to vector<4x1xf32>
    %44 = vector.broadcast %43 : vector<4x1xf32> to vector<4x3xf32>
    %45 = arith.subf %41, %44 : vector<4x3xf32>
    %46 = math.exp %45 : vector<4x3xf32>
    %cst_40 = arith.constant dense<0.000000e+00> : vector<4xf32>
    %47 = vector.multi_reduction <add>, %46, %cst_40 [1] : vector<4x3xf32> to vector<4xf32>
    %48 = vector.shape_cast %47 : vector<4xf32> to vector<4x1xf32>
    %49 = tpu.reciprocal %48 {approx = true} : vector<4x1xf32> -> vector<4x1xf32>
    %50 = vector.broadcast %49 : vector<4x1xf32> to vector<4x3xf32>
    %51 = arith.mulf %46, %50 : vector<4x3xf32>
    %52 = vector.shape_cast %51 : vector<4x3xf32> to vector<4x3x1xf32>
    %53 = vector.broadcast %52 : vector<4x3x1xf32> to vector<4x3x32xf32>
    %54 = arith.mulf %26, %53 : vector<4x3x32xf32>
    %cst_41 = arith.constant dense<0.000000e+00> : vector<4x32xf32>
    %55 = vector.multi_reduction <add>, %54, %cst_41 [1] : vector<4x3x32xf32> to vector<4x32xf32>
    %c0_42 = arith.constant 0 : index
    %c0_43 = arith.constant 0 : index
    %56 = vector.load %arg2[%c0_42, %c0_43] : memref<4x32xf32, #tpu.memory_space<vmem>>, vector<4x32xf32>
    %c0_44 = arith.constant 0 : index
    %c0_45 = arith.constant 0 : index
    %57 = vector.load %arg3[%c0_44, %c0_45] : memref<4x32xf32, #tpu.memory_space<vmem>>, vector<4x32xf32>
    %c0_46 = arith.constant 0 : index
    %c0_47 = arith.constant 0 : index
    %58 = vector.load %arg4[%c0_46, %c0_47] : memref<4x8xf32, #tpu.memory_space<vmem>>, vector<4x8xf32>
    %c0_48 = arith.constant 0 : index
    %c0_49 = arith.constant 0 : index
    %59 = vector.load %arg16[%c0_48, %c0_49] : memref<104x32xf32, #tpu.memory_space<vmem>>, vector<32x32xf32>
    %cst_50 = arith.constant dense<0.000000e+00> : vector<4x32xf32>
    %60 = tpu.matmul %56, %59, %cst_50 {dimension_numbers = #tpu.dot_dimension_numbers<[1], [0], [0], [1], [0, 0, 1, 1], [], []>} : vector<4x32xf32>, vector<32x32xf32>, vector<4x32xf32> -> vector<4x32xf32>
    %c32_51 = arith.constant 32 : index
    %c0_52 = arith.constant 0 : index
    %61 = vector.load %arg16[%c32_51, %c0_52] : memref<104x32xf32, #tpu.memory_space<vmem>>, vector<32x32xf32>
    %cst_53 = arith.constant dense<0.000000e+00> : vector<4x32xf32>
    %62 = tpu.matmul %57, %61, %cst_53 {dimension_numbers = #tpu.dot_dimension_numbers<[1], [0], [0], [1], [0, 0, 1, 1], [], []>} : vector<4x32xf32>, vector<32x32xf32>, vector<4x32xf32> -> vector<4x32xf32>
    %63 = arith.addf %60, %62 : vector<4x32xf32>
    %c64 = arith.constant 64 : index
    %c0_54 = arith.constant 0 : index
    %64 = vector.load %arg16[%c64, %c0_54] : memref<104x32xf32, #tpu.memory_space<vmem>>, vector<8x32xf32>
    %cst_55 = arith.constant dense<0.000000e+00> : vector<4x32xf32>
    %65 = tpu.matmul %58, %64, %cst_55 {dimension_numbers = #tpu.dot_dimension_numbers<[1], [0], [0], [1], [0, 0, 1, 1], [], []>} : vector<4x8xf32>, vector<8x32xf32>, vector<4x32xf32> -> vector<4x32xf32>
    %66 = arith.addf %63, %65 : vector<4x32xf32>
    %c72 = arith.constant 72 : index
    %c0_56 = arith.constant 0 : index
    %67 = vector.load %arg16[%c72, %c0_56] : memref<104x32xf32, #tpu.memory_space<vmem>>, vector<32x32xf32>
    %cst_57 = arith.constant dense<0.000000e+00> : vector<4x32xf32>
    %68 = tpu.matmul %55, %67, %cst_57 {dimension_numbers = #tpu.dot_dimension_numbers<[1], [0], [0], [1], [0, 0, 1, 1], [], []>} : vector<4x32xf32>, vector<32x32xf32>, vector<4x32xf32> -> vector<4x32xf32>
    %69 = arith.addf %66, %68 : vector<4x32xf32>
    %c0_58 = arith.constant 0 : index
    %c0_59 = arith.constant 0 : index
    %70 = vector.load %arg17[%c0_58, %c0_59] : memref<1x32xf32, #tpu.memory_space<vmem>>, vector<1x32xf32>
    %71 = vector.broadcast %70 : vector<1x32xf32> to vector<4x32xf32>
    %72 = arith.addf %69, %71 : vector<4x32xf32>
    %73 = math.tanh %72 : vector<4x32xf32>
    %c0_60 = arith.constant 0 : index
    %c0_61 = arith.constant 0 : index
    %74 = vector.load %arg18[%c0_60, %c0_61] : memref<32x1xf32, #tpu.memory_space<vmem>>, vector<32x1xf32>
    %cst_62 = arith.constant dense<0.000000e+00> : vector<4x1xf32>
    %75 = tpu.matmul %73, %74, %cst_62 {dimension_numbers = #tpu.dot_dimension_numbers<[1], [0], [0], [1], [0, 0, 1, 1], [], []>} : vector<4x32xf32>, vector<32x1xf32>, vector<4x1xf32> -> vector<4x1xf32>
    %c0_63 = arith.constant 0 : index
    %c0_64 = arith.constant 0 : index
    %76 = vector.load %arg19[%c0_63, %c0_64] : memref<1x1xf32, #tpu.memory_space<vmem>>, vector<1x1xf32>
    %77 = vector.broadcast %76 : vector<1x1xf32> to vector<4x1xf32>
    %78 = arith.addf %75, %77 : vector<4x1xf32>
    %c0_65 = arith.constant 0 : index
    %c0_66 = arith.constant 0 : index
    %79 = vector.load %arg30[%c0_65, %c0_66] : memref<4x1xf32, #tpu.memory_space<vmem>>, vector<4x1xf32>
    tpu.vector_store %arg30[%c0_65, %c0_66], %78 {strides = array<i32>} : memref<4x1xf32, #tpu.memory_space<vmem>>, vector<4x1xf32>,
    %c0_67 = arith.constant 0 : index
    %c0_68 = arith.constant 0 : index
    %80 = vector.load %arg20[%c0_67, %c0_68] : memref<64x32xf32, #tpu.memory_space<vmem>>, vector<32x32xf32>
    %cst_69 = arith.constant dense<0.000000e+00> : vector<3x32xf32>
    %81 = tpu.matmul %0, %80, %cst_69 {dimension_numbers = #tpu.dot_dimension_numbers<[1], [0], [0], [1], [0, 0, 1, 1], [], []>} : vector<3x32xf32>, vector<32x32xf32>, vector<3x32xf32> -> vector<3x32xf32>
    %c32_70 = arith.constant 32 : index
    %c0_71 = arith.constant 0 : index
    %82 = vector.load %arg20[%c32_70, %c0_71] : memref<64x32xf32, #tpu.memory_space<vmem>>, vector<32x32xf32>
    %cst_72 = arith.constant dense<0.000000e+00> : vector<3x32xf32>
    %83 = tpu.matmul %1, %82, %cst_72 {dimension_numbers = #tpu.dot_dimension_numbers<[1], [0], [0], [1], [0, 0, 1, 1], [], []>} : vector<3x32xf32>, vector<32x32xf32>, vector<3x32xf32> -> vector<3x32xf32>
    %84 = arith.addf %81, %83 : vector<3x32xf32>
    %c0_73 = arith.constant 0 : index
    %c0_74 = arith.constant 0 : index
    %85 = vector.load %arg21[%c0_73, %c0_74] : memref<1x32xf32, #tpu.memory_space<vmem>>, vector<1x32xf32>
    %86 = vector.broadcast %85 : vector<1x32xf32> to vector<3x32xf32>
    %87 = arith.addf %84, %86 : vector<3x32xf32>
    %c0_75 = arith.constant 0 : index
    %c0_76 = arith.constant 0 : index
    %88 = vector.load %arg22[%c0_75, %c0_76] : memref<104x32xf32, #tpu.memory_space<vmem>>, vector<32x32xf32>
    %cst_77 = arith.constant dense<0.000000e+00> : vector<4x32xf32>
    %89 = tpu.matmul %56, %88, %cst_77 {dimension_numbers = #tpu.dot_dimension_numbers<[1], [0], [0], [1], [0, 0, 1, 1], [], []>} : vector<4x32xf32>, vector<32x32xf32>, vector<4x32xf32> -> vector<4x32xf32>
    %c32_78 = arith.constant 32 : index
    %c0_79 = arith.constant 0 : index
    %90 = vector.load %arg22[%c32_78, %c0_79] : memref<104x32xf32, #tpu.memory_space<vmem>>, vector<32x32xf32>
    %cst_80 = arith.constant dense<0.000000e+00> : vector<4x32xf32>
    %91 = tpu.matmul %57, %90, %cst_80 {dimension_numbers = #tpu.dot_dimension_numbers<[1], [0], [0], [1], [0, 0, 1, 1], [], []>} : vector<4x32xf32>, vector<32x32xf32>, vector<4x32xf32> -> vector<4x32xf32>
    %92 = arith.addf %89, %91 : vector<4x32xf32>
    %c64_81 = arith.constant 64 : index
    %c0_82 = arith.constant 0 : index
    %93 = vector.load %arg22[%c64_81, %c0_82] : memref<104x32xf32, #tpu.memory_space<vmem>>, vector<8x32xf32>
    %cst_83 = arith.constant dense<0.000000e+00> : vector<4x32xf32>
    %94 = tpu.matmul %58, %93, %cst_83 {dimension_numbers = #tpu.dot_dimension_numbers<[1], [0], [0], [1], [0, 0, 1, 1], [], []>} : vector<4x8xf32>, vector<8x32xf32>, vector<4x32xf32> -> vector<4x32xf32>
    %95 = arith.addf %92, %94 : vector<4x32xf32>
    %c72_84 = arith.constant 72 : index
    %c0_85 = arith.constant 0 : index
    %96 = vector.load %arg22[%c72_84, %c0_85] : memref<104x32xf32, #tpu.memory_space<vmem>>, vector<32x32xf32>
    %cst_86 = arith.constant dense<0.000000e+00> : vector<4x32xf32>
    %97 = tpu.matmul %55, %96, %cst_86 {dimension_numbers = #tpu.dot_dimension_numbers<[1], [0], [0], [1], [0, 0, 1, 1], [], []>} : vector<4x32xf32>, vector<32x32xf32>, vector<4x32xf32> -> vector<4x32xf32>
    %98 = arith.addf %95, %97 : vector<4x32xf32>
    %c0_87 = arith.constant 0 : index
    %c0_88 = arith.constant 0 : index
    %99 = vector.load %arg23[%c0_87, %c0_88] : memref<1x32xf32, #tpu.memory_space<vmem>>, vector<1x32xf32>
    %100 = vector.broadcast %99 : vector<1x32xf32> to vector<4x32xf32>
    %101 = arith.addf %98, %100 : vector<4x32xf32>
    %102 = vector.shape_cast %87 : vector<3x32xf32> to vector<3x1x32xf32>
    %103 = vector.shape_cast %101 : vector<4x32xf32> to vector<1x4x32xf32>
    %104 = vector.broadcast %102 : vector<3x1x32xf32> to vector<3x4x32xf32>
    %105 = vector.broadcast %103 : vector<1x4x32xf32> to vector<3x4x32xf32>
    %106 = arith.addf %104, %105 : vector<3x4x32xf32>
    %c0_89 = arith.constant 0 : index
    %c0_90 = arith.constant 0 : index
    %c0_91 = arith.constant 0 : index
    %107 = vector.load %arg7[%c0_89, %c0_90, %c0_91] : memref<3x4x32xf32, #tpu.memory_space<vmem>>, vector<3x4x32xf32>
    %108 = arith.addf %106, %107 : vector<3x4x32xf32>
    %109 = math.tanh %108 : vector<3x4x32xf32>
    %c0_92 = arith.constant 0 : index
    %c0_93 = arith.constant 0 : index
    %110 = vector.load %arg24[%c0_92, %c0_93] : memref<32x16xf32, #tpu.memory_space<vmem>>, vector<32x16xf32>
    %111 = vector.shape_cast %110 : vector<32x16xf32> to vector<1x32x16xf32>
    %112 = vector.shape_cast %111 : vector<1x32x16xf32> to vector<1x32x16xf32>
    %113 = vector.broadcast %112 : vector<1x32x16xf32> to vector<3x32x16xf32>
    "tpu.trace_start"() <{level = 10 : i32, message = "znd,zdk->znk"}> : () -> ()
    %cst_94 = arith.constant dense<0.000000e+00> : vector<3x4x16xf32>
    %114 = tpu.matmul %109, %113, %cst_94 {dimension_numbers = #tpu.dot_dimension_numbers<[2], [1], [1], [2], [0, 0, 0, 1, 1, 2], [0], [0]>} : vector<3x4x32xf32>, vector<3x32x16xf32>, vector<3x4x16xf32> -> vector<3x4x16xf32>
    "tpu.trace_stop"() : () -> ()
    %c0_95 = arith.constant 0 : index
    %c0_96 = arith.constant 0 : index
    %115 = vector.load %arg25[%c0_95, %c0_96] : memref<1x16xf32, #tpu.memory_space<vmem>>, vector<1x16xf32>
    %116 = vector.shape_cast %115 : vector<1x16xf32> to vector<1x1x16xf32>
    %117 = vector.broadcast %116 : vector<1x1x16xf32> to vector<3x4x16xf32>
    %118 = arith.addf %114, %117 : vector<3x4x16xf32>
    %119 = math.tanh %118 : vector<3x4x16xf32>
    %c0_97 = arith.constant 0 : index
    %c0_98 = arith.constant 0 : index
    %120 = vector.load %arg26[%c0_97, %c0_98] : memref<1x16xf32, #tpu.memory_space<vmem>>, vector<1x16xf32>
    %121 = vector.shape_cast %120 : vector<1x16xf32> to vector<1x1x16xf32>
    %122 = vector.broadcast %121 : vector<1x1x16xf32> to vector<3x4x16xf32>
    %123 = arith.mulf %119, %122 : vector<3x4x16xf32>
    %cst_99 = arith.constant dense<0.000000e+00> : vector<3x4xf32>
    %124 = vector.multi_reduction <add>, %123, %cst_99 [2] : vector<3x4x16xf32> to vector<3x4xf32>
    %c0_100 = arith.constant 0 : index
    %c0_101 = arith.constant 0 : index
    %125 = vector.load %arg27[%c0_100, %c0_101] : memref<1x1xf32, #tpu.memory_space<vmem>>, vector<1x1xf32>
    %126 = vector.broadcast %125 : vector<1x1xf32> to vector<3x4xf32>
    %127 = arith.addf %124, %126 : vector<3x4xf32>
    %c0_102 = arith.constant 0 : index
    %c0_103 = arith.constant 0 : index
    %128 = vector.load %arg31[%c0_102, %c0_103] : memref<3x4xf32, #tpu.memory_space<vmem>>, vector<3x4xf32>
    tpu.vector_store %arg31[%c0_102, %c0_103], %127 {strides = array<i32>} : memref<3x4xf32, #tpu.memory_space<vmem>>, vector<3x4xf32>,
    return
  }
}

</mosaic_0001>

<llo_original>
// kernel: reverse
$region0: #{reverse}
  #allocation0 [shape = 's32[1]{0}', space=sflag, size = 0x4, scoped, tag = 'scoped memory for reverse']
  %s0 = inlined_call_operand.vmem [shape: f32[2,8,16], index: 0, kind: input, shape index: {}]
  %s1 = inlined_call_operand.vmem [shape: f32[2,8,16], index: 1, kind: output, shape index: {}]
  %s2 = scalar_lea.vmem %s0, 14
  %v3 = vld [vmem:[%s2] sm:$0x3]
  %4 = vst [vmem:[%s1] sm:$0x3] %v3
  %s5 = scalar_lea.vmem %s0, 12
  %v6 = vld [vmem:[%s5] sm:$0x3]
  %s7 = scalar_lea.vmem %s1, 2
  %8 = vst [vmem:[%s7] sm:$0x3] %v6
  %s9 = scalar_lea.vmem %s0, 10
  %v10 = vld [vmem:[%s9] sm:$0x3]
  %s11 = scalar_lea.vmem %s1, 4
  %12 = vst [vmem:[%s11] sm:$0x3] %v10
  %s13 = scalar_lea.vmem %s0, 8
  %v14 = vld [vmem:[%s13] sm:$0x3]
  %s15 = scalar_lea.vmem %s1, 6
  %16 = vst [vmem:[%s15] sm:$0x3] %v14
  %s17 = scalar_lea.vmem %s0, 6
  %v18 = vld [vmem:[%s17] sm:$0x3]
  %s19 = scalar_lea.vmem %s1, 8
  %20 = vst [vmem:[%s19] sm:$0x3] %v18
  %s21 = scalar_lea.vmem %s0, 4
  %v22 = vld [vmem:[%s21] sm:$0x3]
  %s23 = scalar_lea.vmem %s1, 10
  %24 = vst [vmem:[%s23] sm:$0x3] %v22
  %s25 = scalar_lea.vmem %s0, 2
  %v26 = vld [vmem:[%s25] sm:$0x3]
  %s27 = scalar_lea.vmem %s1, 12
  %28 = vst [vmem:[%s27] sm:$0x3] %v26
  %v29 = vld [vmem:[%s0] sm:$0x3]
  %s30 = scalar_lea.vmem %s1, 14
  %31 = vst [vmem:[%s30] sm:$0x3] %v29

// kernel: _device_forward_impl.2
$region0: #{_device_forward_impl.2}
  #allocation0 [shape = 'u32[]', space=smem, size = 0x4, offset = 0x4, fixed_abs, tag = 'smem constant byte address 0x4 - core index']
  #allocation1 [shape = 'u32[72,128]{1,0:T(1,128)}', space=vmem, size = 0x9000, scoped, tag = 'internal scratch']
  %s0 = inlined_call_operand.vmem [shape: f32[8,2,128], index: 0, kind: input, shape index: {}]
  %s1 = inlined_call_operand.vmem [shape: s32[2,1], index: 1, kind: input, shape index: {}]
  %s2 = inlined_call_operand.vmem [shape: f32[32,128], index: 2, kind: input, shape index: {}]
  %s3 = inlined_call_operand.vmem [shape: f32[8,2,16], index: 3, kind: output, shape index: {0}]
  %s4 = inlined_call_operand.vmem [shape: f32[8,2,16], index: 4, kind: output, shape index: {1}]
  %5 = xla_tuple %s3, %s4
  %s6 = sld [smem:[#allocation0]]
  $region30: #{_device_forward_impl.2} parent=0
    _
  %s8 = ssub.s32 1, %s6
  %s9 = scalar_select 0, %s8, %s6
  // Predicated region
  $region2: #{_device_forward_impl.2} parent=0 // pred_check
    _
  $region3: #{_device_forward_impl.2} parent=0 // pred_check_branch
    %11 = sbr.rel (0) target = $region5
  $region4: #{_device_forward_impl.2} parent=0 // pred_region
    _
  $region5: #{_device_forward_impl.2} parent=0 // pred_fallthru
    _
  // Predicated region
  $region6: #{_device_forward_impl.2} parent=0 // pred_check
    _
  $region7: #{_device_forward_impl.2} parent=0 // pred_check_branch
    %13 = sbr.rel (0) target = $region9
  $region8: #{_device_forward_impl.2} parent=0 // pred_region
    _
  $region9: #{_device_forward_impl.2} parent=0 // pred_fallthru
    _
  // Predicated region
  $region10: #{_device_forward_impl.2} parent=0 // pred_check
    _
  $region11: #{_device_forward_impl.2} parent=0 // pred_check_branch
    %15 = sbr.rel (0) target = $region13
  $region12: #{_device_forward_impl.2} parent=0 // pred_region
    _
  $region13: #{_device_forward_impl.2} parent=0 // pred_fallthru
    _
  %v16 = vld [vmem:[%s1] sm:$0x3]
  %v17 = vlaneseq
  %v18 = vand.u32 %v17, 127
  %v19 = vld [vmem:[%s2] sm:$0xff]
  %v20 = vld [vmem:[%s2 + $0x8] sm:$0xff]
  %v21 = vld [vmem:[%s2 + $0x10] sm:$0xff]
  %v22 = vld [vmem:[%s2 + $0x18] sm:$0xff]
  %v23 = vld [vmem:[%s0] sm:$0x3]
  %vm24 = vcmask 261120
  %v26 = vsel %vm24, 0.0, 0
  %28 = vmatpush.msra.mxu0 0.0
  %29 = vmatpush.msra.mxu0 0.0
  %30 = vmatpush.msra.mxu0 0.0
  %31 = vmatpush.msra.mxu0 0.0
  %32 = vmatpush.msra.mxu0 0.0
  %33 = vmatpush.msra.mxu0 0.0
  %34 = vmatpush.msra.mxu0 0.0
  %35 = vmatpush.msra.mxu0 0.0
  %36 = vmatpush.msra.mxu0 0.0
  %37 = vmatpush.msra.mxu0 0.0
  %38 = vmatpush.msra.mxu0 0.0
  %39 = vmatpush.msra.mxu0 0.0
  %40 = vmatpush.msra.mxu0 %v22
  %41 = vmatpush.msra.mxu0 %v21
  %42 = vmatpush.msra.mxu0 %v20
  %43 = vmatpush.msra.mxu0 %v19
  %44 = vmatmul.f32.gmra.mxu0 %v26
  %v45 = vpop.f32.mrf.mxu0
  %v46 = vadd.f32 0.0, %v45
  %47 = vdwg.mxu0
  %v48 = vadd.f32 %v23, %v46
  %v49 = vsub.f32 0.0, %v48
  %v50 = vmul.f32 %v49, 1.442695
  %v51 = vpow.pop %v50
  %v52 = vadd.f32 %v51, 1.0
  %v53 = vrcp.pop %v52
  %v54 = vmul.f32 %v52, %v53
  %v55 = vsub.f32 1.0, %v54
  %v56 = vmul.f32 %v53, %v55
  %v57 = vadd.f32 %v53, %v56
  %vm58 = vweird.f32 %v52
  %vm59 = vweird.f32 %v53
  %vm60 = vmor %vm58, %vm59
  %v61 = vsel %vm60, %v53, %v57
  %v62 = vand.u32 2147483647, %v52
  %vm63 = vcmp.eq.f32.partialorder %v62, 8.507059e+37
  %v64 = vand.u32 %v52, 2147483648
  %v65 = vor.u32 1.1754944e-38, %v64
  %v66 = vsel %vm63, %v65, %v61
  %v67 = vmul.f32 1.0, %v66
  %v68 = vtanh.pop %v48
  %v69 = vmul.f32 %v67, 0.0
  %71 = vrot.lane.b32.xlu0 %v68, 32
  %v72 = vpop.permute.xlu0 %71
  %v74 = vmul.f32 %v67, %v72
  %76 = vrot.lane.b32.xlu0 %v74, 32
  %v77 = vpop.permute.xlu0 %76
  %v79 = vadd.f32 %v69, %v77
  %v80 = vtanh.pop %v79
  %82 = vrot.lane.b32.xlu0 %v80, 32
  %v83 = vpop.permute.xlu0 %82
  %v85 = vmul.f32 %v67, %v83
  %vm86 = vcmp.lt.s32.totalorder %v18, 16
  %v87 = vsel %vm86, 0, 7
  %88 = vset.pattern.permute.xlu0 0
  %89 = vperm.xlu0 %88, %v16
  %v90 = vpop.permute.xlu0 %89
  %vm91 = vcmp.gt.s32.totalorder %v90, %v87
  %93 = vrot.lane.b32.xlu0 %v79, 96
  %v94 = vpop.permute.xlu0 %93
  %v96 = vsel %vm91, %v94, 0.0
  %98 = vrot.lane.b32.xlu0 %v85, 64
  %v99 = vpop.permute.xlu0 %98
  %v101 = vsel %vm91, %v99, 0.0
  %vm102 = vcmask 123904
  %103 = vst.msk [vmem:[%s3] sm:$0x3] %vm102, %v101
  %105 = vrot.lane.b32.xlu0 %v101, 112
  %v106 = vpop.permute.xlu0 %105
  %s108 = scalar_lea.vmem %s4, 14
  %109 = vst.msk [vmem:[%s108] sm:$0x3] %vm102, %v106
  %s110 = scalar_lea.vmem %s0, 2
  %v111 = vld [vmem:[%s110] sm:$0x3]
  %v112 = vsel %vm24, %v101, 0
  %114 = vmatpush.msra.mxu0 0.0
  %115 = vmatpush.msra.mxu0 0.0
  %116 = vmatpush.msra.mxu0 0.0
  %117 = vmatpush.msra.mxu0 0.0
  %118 = vmatpush.msra.mxu0 0.0
  %119 = vmatpush.msra.mxu0 0.0
  %120 = vmatpush.msra.mxu0 0.0
  %121 = vmatpush.msra.mxu0 0.0
  %122 = vmatpush.msra.mxu0 0.0
  %123 = vmatpush.msra.mxu0 0.0
  %124 = vmatpush.msra.mxu0 0.0
  %125 = vmatpush.msra.mxu0 0.0
  %126 = vmatpush.msra.mxu0 %v22
  %127 = vmatpush.msra.mxu0 %v21
  %128 = vmatpush.msra.mxu0 %v20
  %129 = vmatpush.msra.mxu0 %v19
  %130 = vmatmul.f32.gmra.mxu0 %v112
  %v131 = vpop.f32.mrf.mxu0
  %v132 = vadd.f32 0.0, %v131
  %133 = vdwg.mxu0
  %v134 = vadd.f32 %v111, %v132
  %v135 = vsub.f32 0.0, %v134
  %v136 = vmul.f32 %v135, 1.442695
  %v137 = vpow.pop %v136
  %v138 = vadd.f32 %v137, 1.0
  %v139 = vrcp.pop %v138
  %v140 = vmul.f32 %v138, %v139
  %v141 = vsub.f32 1.0, %v140
  %v142 = vmul.f32 %v139, %v141
  %v143 = vadd.f32 %v139, %v142
  %vm144 = vweird.f32 %v138
  %vm145 = vweird.f32 %v139
  %vm146 = vmor %vm144, %vm145
  %v147 = vsel %vm146, %v139, %v143
  %v148 = vand.u32 2147483647, %v138
  %vm149 = vcmp.eq.f32.partialorder %v148, 8.507059e+37
  %v150 = vand.u32 %v138, 2147483648
  %v151 = vor.u32 1.1754944e-38, %v150
  %v152 = vsel %vm149, %v151, %v147
  %v153 = vmul.f32 1.0, %v152
  %v154 = vtanh.pop %v134
  %156 = vrot.lane.b32.xlu0 %v96, 32
  %v157 = vpop.permute.xlu0 %156
  %v159 = vmul.f32 %v153, %v157
  %161 = vrot.lane.b32.xlu0 %v154, 32
  %v162 = vpop.permute.xlu0 %161
  %v164 = vmul.f32 %v153, %v162
  %166 = vrot.lane.b32.xlu0 %v164, 32
  %v167 = vpop.permute.xlu0 %166
  %v169 = vadd.f32 %v159, %v167
  %v170 = vtanh.pop %v169
  %172 = vrot.lane.b32.xlu0 %v170, 32
  %v173 = vpop.permute.xlu0 %172
  %v175 = vmul.f32 %v153, %v173
  %v176 = vsel %vm86, 1, 6
  %vm177 = vcmp.gt.s32.totalorder %v90, %v176
  %179 = vrot.lane.b32.xlu0 %v169, 96
  %v180 = vpop.permute.xlu0 %179
  %v182 = vsel %vm177, %v180, 0.0
  %184 = vrot.lane.b32.xlu0 %v175, 64
  %v185 = vpop.permute.xlu0 %184
  %v187 = vsel %vm177, %v185, 0.0
  %s188 = scalar_lea.vmem %s3, 2
  %189 = vst.msk [vmem:[%s188] sm:$0x3] %vm102, %v187
  %191 = vrot.lane.b32.xlu0 %v187, 112
  %v192 = vpop.permute.xlu0 %191
  %s194 = scalar_lea.vmem %s4, 12
  %195 = vst.msk [vmem:[%s194] sm:$0x3] %vm102, %v192
  %s196 = scalar_lea.vmem %s0, 4
  %v197 = vld [vmem:[%s196] sm:$0x3]
  %v198 = vsel %vm24, %v187, 0
  %200 = vmatpush.msra.mxu0 0.0
  %201 = vmatpush.msra.mxu0 0.0
  %202 = vmatpush.msra.mxu0 0.0
  %203 = vmatpush.msra.mxu0 0.0
  %204 = vmatpush.msra.mxu0 0.0
  %205 = vmatpush.msra.mxu0 0.0
  %206 = vmatpush.msra.mxu0 0.0
  %207 = vmatpush.msra.mxu0 0.0
  %208 = vmatpush.msra.mxu0 0.0
  %209 = vmatpush.msra.mxu0 0.0
  %210 = vmatpush.msra.mxu0 0.0
  %211 = vmatpush.msra.mxu0 0.0
  %212 = vmatpush.msra.mxu0 %v22
  %213 = vmatpush.msra.mxu0 %v21
  %214 = vmatpush.msra.mxu0 %v20
  %215 = vmatpush.msra.mxu0 %v19
  %216 = vmatmul.f32.gmra.mxu0 %v198
  %v217 = vpop.f32.mrf.mxu0
  %v218 = vadd.f32 0.0, %v217
  %219 = vdwg.mxu0
  %v220 = vadd.f32 %v197, %v218
  %v221 = vsub.f32 0.0, %v220
  %v222 = vmul.f32 %v221, 1.442695
  %v223 = vpow.pop %v222
  %v224 = vadd.f32 %v223, 1.0
  %v225 = vrcp.pop %v224
  %v226 = vmul.f32 %v224, %v225
  %v227 = vsub.f32 1.0, %v226
  %v228 = vmul.f32 %v225, %v227
  %v229 = vadd.f32 %v225, %v228
  %vm230 = vweird.f32 %v224
  %vm231 = vweird.f32 %v225
  %vm232 = vmor %vm230, %vm231
  %v233 = vsel %vm232, %v225, %v229
  %v234 = vand.u32 2147483647, %v224
  %vm235 = vcmp.eq.f32.partialorder %v234, 8.507059e+37
  %v236 = vand.u32 %v224, 2147483648
  %v237 = vor.u32 1.1754944e-38, %v236
  %v238 = vsel %vm235, %v237, %v233
  %v239 = vmul.f32 1.0, %v238
  %v240 = vtanh.pop %v220
  %242 = vrot.lane.b32.xlu0 %v182, 32
  %v243 = vpop.permute.xlu0 %242
  %v245 = vmul.f32 %v239, %v243
  %247 = vrot.lane.b32.xlu0 %v240, 32
  %v248 = vpop.permute.xlu0 %247
  %v250 = vmul.f32 %v239, %v248
  %252 = vrot.lane.b32.xlu0 %v250, 32
  %v253 = vpop.permute.xlu0 %252
  %v255 = vadd.f32 %v245, %v253
  %v256 = vtanh.pop %v255
  %258 = vrot.lane.b32.xlu0 %v256, 32
  %v259 = vpop.permute.xlu0 %258
  %v261 = vmul.f32 %v239, %v259
  %v262 = vsel %vm86, 2, 5
  %vm263 = vcmp.gt.s32.totalorder %v90, %v262
  %265 = vrot.lane.b32.xlu0 %v255, 96
  %v266 = vpop.permute.xlu0 %265
  %v268 = vsel %vm263, %v266, 0.0
  %270 = vrot.lane.b32.xlu0 %v261, 64
  %v271 = vpop.permute.xlu0 %270
  %v273 = vsel %vm263, %v271, 0.0
  %s274 = scalar_lea.vmem %s3, 4
  %275 = vst.msk [vmem:[%s274] sm:$0x3] %vm102, %v273
  %277 = vrot.lane.b32.xlu0 %v273, 112
  %v278 = vpop.permute.xlu0 %277
  %s280 = scalar_lea.vmem %s4, 10
  %281 = vst.msk [vmem:[%s280] sm:$0x3] %vm102, %v278
  %s282 = scalar_lea.vmem %s0, 6
  %v283 = vld [vmem:[%s282] sm:$0x3]
  %v284 = vsel %vm24, %v273, 0
  %286 = vmatpush.msra.mxu0 0.0
  %287 = vmatpush.msra.mxu0 0.0
  %288 = vmatpush.msra.mxu0 0.0
  %289 = vmatpush.msra.mxu0 0.0
  %290 = vmatpush.msra.mxu0 0.0
  %291 = vmatpush.msra.mxu0 0.0
  %292 = vmatpush.msra.mxu0 0.0
  %293 = vmatpush.msra.mxu0 0.0
  %294 = vmatpush.msra.mxu0 0.0
  %295 = vmatpush.msra.mxu0 0.0
  %296 = vmatpush.msra.mxu0 0.0
  %297 = vmatpush.msra.mxu0 0.0
  %298 = vmatpush.msra.mxu0 %v22
  %299 = vmatpush.msra.mxu0 %v21
  %300 = vmatpush.msra.mxu0 %v20
  %301 = vmatpush.msra.mxu0 %v19
  %302 = vmatmul.f32.gmra.mxu0 %v284
  %v303 = vpop.f32.mrf.mxu0
  %v304 = vadd.f32 0.0, %v303
  %305 = vdwg.mxu0
  %v306 = vadd.f32 %v283, %v304
  %v307 = vsub.f32 0.0, %v306
  %v308 = vmul.f32 %v307, 1.442695
  %v309 = vpow.pop %v308
  %v310 = vadd.f32 %v309, 1.0
  %v311 = vrcp.pop %v310
  %v312 = vmul.f32 %v310, %v311
  %v313 = vsub.f32 1.0, %v312
  %v314 = vmul.f32 %v311, %v313
  %v315 = vadd.f32 %v311, %v314
  %vm316 = vweird.f32 %v310
  %vm317 = vweird.f32 %v311
  %vm318 = vmor %vm316, %vm317
  %v319 = vsel %vm318, %v311, %v315
  %v320 = vand.u32 2147483647, %v310
  %vm321 = vcmp.eq.f32.partialorder %v320, 8.507059e+37
  %v322 = vand.u32 %v310, 2147483648
  %v323 = vor.u32 1.1754944e-38, %v322
  %v324 = vsel %vm321, %v323, %v319
  %v325 = vmul.f32 1.0, %v324
  %v326 = vtanh.pop %v306
  %328 = vrot.lane.b32.xlu0 %v268, 32
  %v329 = vpop.permute.xlu0 %328
  %v331 = vmul.f32 %v325, %v329
  %333 = vrot.lane.b32.xlu0 %v326, 32
  %v334 = vpop.permute.xlu0 %333
  %v336 = vmul.f32 %v325, %v334
  %338 = vrot.lane.b32.xlu0 %v336, 32
  %v339 = vpop.permute.xlu0 %338
  %v341 = vadd.f32 %v331, %v339
  %v342 = vtanh.pop %v341
  %344 = vrot.lane.b32.xlu0 %v342, 32
  %v345 = vpop.permute.xlu0 %344
  %v347 = vmul.f32 %v325, %v345
  %v348 = vsel %vm86, 3, 4
  %vm349 = vcmp.gt.s32.totalorder %v90, %v348
  %351 = vrot.lane.b32.xlu0 %v341, 96
  %v352 = vpop.permute.xlu0 %351
  %v354 = vsel %vm349, %v352, 0.0
  %356 = vrot.lane.b32.xlu0 %v347, 64
  %v357 = vpop.permute.xlu0 %356
  %v359 = vsel %vm349, %v357, 0.0
  %s360 = scalar_lea.vmem %s3, 6
  %361 = vst.msk [vmem:[%s360] sm:$0x3] %vm102, %v359
  %363 = vrot.lane.b32.xlu0 %v359, 112
  %v364 = vpop.permute.xlu0 %363
  %s366 = scalar_lea.vmem %s4, 8
  %367 = vst.msk [vmem:[%s366] sm:$0x3] %vm102, %v364
  %s368 = scalar_lea.vmem %s0, 8
  %v369 = vld [vmem:[%s368] sm:$0x3]
  %v370 = vsel %vm24, %v359, 0
  %372 = vmatpush.msra.mxu0 0.0
  %373 = vmatpush.msra.mxu0 0.0
  %374 = vmatpush.msra.mxu0 0.0
  %375 = vmatpush.msra.mxu0 0.0
  %376 = vmatpush.msra.mxu0 0.0
  %377 = vmatpush.msra.mxu0 0.0
  %378 = vmatpush.msra.mxu0 0.0
  %379 = vmatpush.msra.mxu0 0.0
  %380 = vmatpush.msra.mxu0 0.0
  %381 = vmatpush.msra.mxu0 0.0
  %382 = vmatpush.msra.mxu0 0.0
  %383 = vmatpush.msra.mxu0 0.0
  %384 = vmatpush.msra.mxu0 %v22
  %385 = vmatpush.msra.mxu0 %v21
  %386 = vmatpush.msra.mxu0 %v20
  %387 = vmatpush.msra.mxu0 %v19
  %388 = vmatmul.f32.gmra.mxu0 %v370
  %v389 = vpop.f32.mrf.mxu0
  %v390 = vadd.f32 0.0, %v389
  %391 = vdwg.mxu0
  %v392 = vadd.f32 %v369, %v390
  %v393 = vsub.f32 0.0, %v392
  %v394 = vmul.f32 %v393, 1.442695
  %v395 = vpow.pop %v394
  %v396 = vadd.f32 %v395, 1.0
  %v397 = vrcp.pop %v396
  %v398 = vmul.f32 %v396, %v397
  %v399 = vsub.f32 1.0, %v398
  %v400 = vmul.f32 %v397, %v399
  %v401 = vadd.f32 %v397, %v400
  %vm402 = vweird.f32 %v396
  %vm403 = vweird.f32 %v397
  %vm404 = vmor %vm402, %vm403
  %v405 = vsel %vm404, %v397, %v401
  %v406 = vand.u32 2147483647, %v396
  %vm407 = vcmp.eq.f32.partialorder %v406, 8.507059e+37
  %v408 = vand.u32 %v396, 2147483648
  %v409 = vor.u32 1.1754944e-38, %v408
  %v410 = vsel %vm407, %v409, %v405
  %v411 = vmul.f32 1.0, %v410
  %v412 = vtanh.pop %v392
  %414 = vrot.lane.b32.xlu0 %v354, 32
  %v415 = vpop.permute.xlu0 %414
  %v417 = vmul.f32 %v411, %v415
  %419 = vrot.lane.b32.xlu0 %v412, 32
  %v420 = vpop.permute.xlu0 %419
  %v422 = vmul.f32 %v411, %v420
  %424 = vrot.lane.b32.xlu0 %v422, 32
  %v425 = vpop.permute.xlu0 %424
  %v427 = vadd.f32 %v417, %v425
  %v428 = vtanh.pop %v427
  %430 = vrot.lane.b32.xlu0 %v428, 32
  %v431 = vpop.permute.xlu0 %430
  %v433 = vmul.f32 %v411, %v431
  %v434 = vsel %vm86, 4, 3
  %vm435 = vcmp.gt.s32.totalorder %v90, %v434
  %437 = vrot.lane.b32.xlu0 %v427, 96
  %v438 = vpop.permute.xlu0 %437
  %v440 = vsel %vm435, %v438, 0.0
  %442 = vrot.lane.b32.xlu0 %v433, 64
  %v443 = vpop.permute.xlu0 %442
  %v445 = vsel %vm435, %v443, 0.0
  %s446 = scalar_lea.vmem %s3, 8
  %447 = vst.msk [vmem:[%s446] sm:$0x3] %vm102, %v445
  %449 = vrot.lane.b32.xlu0 %v445, 112
  %v450 = vpop.permute.xlu0 %449
  %s452 = scalar_lea.vmem %s4, 6
  %453 = vst.msk [vmem:[%s452] sm:$0x3] %vm102, %v450
  %s454 = scalar_lea.vmem %s0, 10
  %v455 = vld [vmem:[%s454] sm:$0x3]
  %v456 = vsel %vm24, %v445, 0
  %458 = vmatpush.msra.mxu0 0.0
  %459 = vmatpush.msra.mxu0 0.0
  %460 = vmatpush.msra.mxu0 0.0
  %461 = vmatpush.msra.mxu0 0.0
  %462 = vmatpush.msra.mxu0 0.0
  %463 = vmatpush.msra.mxu0 0.0
  %464 = vmatpush.msra.mxu0 0.0
  %465 = vmatpush.msra.mxu0 0.0
  %466 = vmatpush.msra.mxu0 0.0
  %467 = vmatpush.msra.mxu0 0.0
  %468 = vmatpush.msra.mxu0 0.0
  %469 = vmatpush.msra.mxu0 0.0
  %470 = vmatpush.msra.mxu0 %v22
  %471 = vmatpush.msra.mxu0 %v21
  %472 = vmatpush.msra.mxu0 %v20
  %473 = vmatpush.msra.mxu0 %v19
  %474 = vmatmul.f32.gmra.mxu0 %v456
  %v475 = vpop.f32.mrf.mxu0
  %v476 = vadd.f32 0.0, %v475
  %477 = vdwg.mxu0
  %v478 = vadd.f32 %v455, %v476
  %v479 = vsub.f32 0.0, %v478
  %v480 = vmul.f32 %v479, 1.442695
  %v481 = vpow.pop %v480
  %v482 = vadd.f32 %v481, 1.0
  %v483 = vrcp.pop %v482
  %v484 = vmul.f32 %v482, %v483
  %v485 = vsub.f32 1.0, %v484
  %v486 = vmul.f32 %v483, %v485
  %v487 = vadd.f32 %v483, %v486
  %vm488 = vweird.f32 %v482
  %vm489 = vweird.f32 %v483
  %vm490 = vmor %vm488, %vm489
  %v491 = vsel %vm490, %v483, %v487
  %v492 = vand.u32 2147483647, %v482
  %vm493 = vcmp.eq.f32.partialorder %v492, 8.507059e+37
  %v494 = vand.u32 %v482, 2147483648
  %v495 = vor.u32 1.1754944e-38, %v494
  %v496 = vsel %vm493, %v495, %v491
  %v497 = vmul.f32 1.0, %v496
  %v498 = vtanh.pop %v478
  %500 = vrot.lane.b32.xlu0 %v440, 32
  %v501 = vpop.permute.xlu0 %500
  %v503 = vmul.f32 %v497, %v501
  %505 = vrot.lane.b32.xlu0 %v498, 32
  %v506 = vpop.permute.xlu0 %505
  %v508 = vmul.f32 %v497, %v506
  %510 = vrot.lane.b32.xlu0 %v508, 32
  %v511 = vpop.permute.xlu0 %510
  %v513 = vadd.f32 %v503, %v511
  %v514 = vtanh.pop %v513
  %516 = vrot.lane.b32.xlu0 %v514, 32
  %v517 = vpop.permute.xlu0 %516
  %v519 = vmul.f32 %v497, %v517
  %v520 = vsel %vm86, 5, 2
  %vm521 = vcmp.gt.s32.totalorder %v90, %v520
  %523 = vrot.lane.b32.xlu0 %v513, 96
  %v524 = vpop.permute.xlu0 %523
  %v526 = vsel %vm521, %v524, 0.0
  %528 = vrot.lane.b32.xlu0 %v519, 64
  %v529 = vpop.permute.xlu0 %528
  %v531 = vsel %vm521, %v529, 0.0
  %s532 = scalar_lea.vmem %s3, 10
  %533 = vst.msk [vmem:[%s532] sm:$0x3] %vm102, %v531
  %535 = vrot.lane.b32.xlu0 %v531, 112
  %v536 = vpop.permute.xlu0 %535
  %s538 = scalar_lea.vmem %s4, 4
  %539 = vst.msk [vmem:[%s538] sm:$0x3] %vm102, %v536
  %s540 = scalar_lea.vmem %s0, 12
  %v541 = vld [vmem:[%s540] sm:$0x3]
  %v542 = vsel %vm24, %v531, 0
  %544 = vmatpush.msra.mxu0 0.0
  %545 = vmatpush.msra.mxu0 0.0
  %546 = vmatpush.msra.mxu0 0.0
  %547 = vmatpush.msra.mxu0 0.0
  %548 = vmatpush.msra.mxu0 0.0
  %549 = vmatpush.msra.mxu0 0.0
  %550 = vmatpush.msra.mxu0 0.0
  %551 = vmatpush.msra.mxu0 0.0
  %552 = vmatpush.msra.mxu0 0.0
  %553 = vmatpush.msra.mxu0 0.0
  %554 = vmatpush.msra.mxu0 0.0
  %555 = vmatpush.msra.mxu0 0.0
  %556 = vmatpush.msra.mxu0 %v22
  %557 = vmatpush.msra.mxu0 %v21
  %558 = vmatpush.msra.mxu0 %v20
  %559 = vmatpush.msra.mxu0 %v19
  %560 = vmatmul.f32.gmra.mxu0 %v542
  %v561 = vpop.f32.mrf.mxu0
  %v562 = vadd.f32 0.0, %v561
  %563 = vdwg.mxu0
  %v564 = vadd.f32 %v541, %v562
  %v565 = vsub.f32 0.0, %v564
  %v566 = vmul.f32 %v565, 1.442695
  %v567 = vpow.pop %v566
  %v568 = vadd.f32 %v567, 1.0
  %v569 = vrcp.pop %v568
  %v570 = vmul.f32 %v568, %v569
  %v571 = vsub.f32 1.0, %v570
  %v572 = vmul.f32 %v569, %v571
  %v573 = vadd.f32 %v569, %v572
  %vm574 = vweird.f32 %v568
  %vm575 = vweird.f32 %v569
  %vm576 = vmor %vm574, %vm575
  %v577 = vsel %vm576, %v569, %v573
  %v578 = vand.u32 2147483647, %v568
  %vm579 = vcmp.eq.f32.partialorder %v578, 8.507059e+37
  %v580 = vand.u32 %v568, 2147483648
  %v581 = vor.u32 1.1754944e-38, %v580
  %v582 = vsel %vm579, %v581, %v577
  %v583 = vmul.f32 1.0, %v582
  %v584 = vtanh.pop %v564
  %586 = vrot.lane.b32.xlu0 %v526, 32
  %v587 = vpop.permute.xlu0 %586
  %v589 = vmul.f32 %v583, %v587
  %591 = vrot.lane.b32.xlu0 %v584, 32
  %v592 = vpop.permute.xlu0 %591
  %v594 = vmul.f32 %v583, %v592
  %596 = vrot.lane.b32.xlu0 %v594, 32
  %v597 = vpop.permute.xlu0 %596
  %v599 = vadd.f32 %v589, %v597
  %v600 = vtanh.pop %v599
  %602 = vrot.lane.b32.xlu0 %v600, 32
  %v603 = vpop.permute.xlu0 %602
  %v605 = vmul.f32 %v583, %v603
  %v606 = vsel %vm86, 6, 1
  %vm607 = vcmp.gt.s32.totalorder %v90, %v606
  %609 = vrot.lane.b32.xlu0 %v599, 96
  %v610 = vpop.permute.xlu0 %609
  %v612 = vsel %vm607, %v610, 0.0
  %614 = vrot.lane.b32.xlu0 %v605, 64
  %v615 = vpop.permute.xlu0 %614
  %v617 = vsel %vm607, %v615, 0.0
  %s618 = scalar_lea.vmem %s3, 12
  %619 = vst.msk [vmem:[%s618] sm:$0x3] %vm102, %v617
  %621 = vrot.lane.b32.xlu0 %v617, 112
  %v622 = vpop.permute.xlu0 %621
  %s624 = scalar_lea.vmem %s4, 2
  %625 = vst.msk [vmem:[%s624] sm:$0x3] %vm102, %v622
  %s626 = scalar_lea.vmem %s0, 14
  %v627 = vld [vmem:[%s626] sm:$0x3]
  %v628 = vsel %vm24, %v617, 0
  %630 = vmatpush.msra.mxu0 0.0
  %631 = vmatpush.msra.mxu0 0.0
  %632 = vmatpush.msra.mxu0 0.0
  %633 = vmatpush.msra.mxu0 0.0
  %634 = vmatpush.msra.mxu0 0.0
  %635 = vmatpush.msra.mxu0 0.0
  %636 = vmatpush.msra.mxu0 0.0
  %637 = vmatpush.msra.mxu0 0.0
  %638 = vmatpush.msra.mxu0 0.0
  %639 = vmatpush.msra.mxu0 0.0
  %640 = vmatpush.msra.mxu0 0.0
  %641 = vmatpush.msra.mxu0 0.0
  %642 = vmatpush.msra.mxu0 %v22
  %643 = vmatpush.msra.mxu0 %v21
  %644 = vmatpush.msra.mxu0 %v20
  %645 = vmatpush.msra.mxu0 %v19
  %646 = vmatmul.f32.gmra.mxu0 %v628
  %v647 = vpop.f32.mrf.mxu0
  %v648 = vadd.f32 0.0, %v647
  %649 = vdwg.mxu0
  %v650 = vadd.f32 %v627, %v648
  %v651 = vsub.f32 0.0, %v650
  %v652 = vmul.f32 %v651, 1.442695
  %v653 = vpow.pop %v652
  %v654 = vadd.f32 %v653, 1.0
  %v655 = vrcp.pop %v654
  %v656 = vmul.f32 %v654, %v655
  %v657 = vsub.f32 1.0, %v656
  %v658 = vmul.f32 %v655, %v657
  %v659 = vadd.f32 %v655, %v658
  %vm660 = vweird.f32 %v654
  %vm661 = vweird.f32 %v655
  %vm662 = vmor %vm660, %vm661
  %v663 = vsel %vm662, %v655, %v659
  %v664 = vand.u32 2147483647, %v654
  %vm665 = vcmp.eq.f32.partialorder %v664, 8.507059e+37
  %v666 = vand.u32 %v654, 2147483648
  %v667 = vor.u32 1.1754944e-38, %v666
  %v668 = vsel %vm665, %v667, %v663
  %v669 = vmul.f32 1.0, %v668
  %v670 = vtanh.pop %v650
  %672 = vrot.lane.b32.xlu0 %v612, 32
  %v673 = vpop.permute.xlu0 %672
  %v675 = vmul.f32 %v669, %v673
  %677 = vrot.lane.b32.xlu0 %v670, 32
  %v678 = vpop.permute.xlu0 %677
  %v680 = vmul.f32 %v669, %v678
  %682 = vrot.lane.b32.xlu0 %v680, 32
  %v683 = vpop.permute.xlu0 %682
  %v685 = vadd.f32 %v675, %v683
  %v686 = vtanh.pop %v685
  %688 = vrot.lane.b32.xlu0 %v686, 32
  %v689 = vpop.permute.xlu0 %688
  %v691 = vmul.f32 %v669, %v689
  %v692 = vsel %vm86, 7, 0
  %vm693 = vcmp.gt.s32.totalorder %v90, %v692
  %695 = vrot.lane.b32.xlu0 %v691, 64
  %v696 = vpop.permute.xlu0 %695
  %v698 = vsel %vm693, %v696, 0.0
  %s699 = scalar_lea.vmem %s3, 14
  %700 = vst.msk [vmem:[%s699] sm:$0x3] %vm102, %v698
  %702 = vrot.lane.b32.xlu0 %v698, 112
  %v703 = vpop.permute.xlu0 %702
  %705 = vst.msk [vmem:[%s4] sm:$0x3] %vm102, %v703
  // Predicated region
  $region14: #{_device_forward_impl.2} parent=0 // pred_check
    _
  $region15: #{_device_forward_impl.2} parent=0 // pred_check_branch
    %707 = sbr.rel (0) target = $region17
  $region16: #{_device_forward_impl.2} parent=0 // pred_region
    _
  $region17: #{_device_forward_impl.2} parent=0 // pred_fallthru
    _
  // Predicated region
  $region18: #{_device_forward_impl.2} parent=0 // pred_check
    _
  $region19: #{_device_forward_impl.2} parent=0 // pred_check_branch
    %709 = sbr.rel (0) target = $region21
  $region20: #{_device_forward_impl.2} parent=0 // pred_region
    _
  $region21: #{_device_forward_impl.2} parent=0 // pred_fallthru
    _
  // Predicated region
  $region22: #{_device_forward_impl.2} parent=0 // pred_check
    _
  $region23: #{_device_forward_impl.2} parent=0 // pred_check_branch
    %711 = sbr.rel (0) target = $region25
  $region24: #{_device_forward_impl.2} parent=0 // pred_region
    _
  $region25: #{_device_forward_impl.2} parent=0 // pred_fallthru
    _
  // Predicated region
  $region26: #{_device_forward_impl.2} parent=0 // pred_check
    _
  $region27: #{_device_forward_impl.2} parent=0 // pred_check_branch
    %713 = sbr.rel (0) target = $region29
  $region28: #{_device_forward_impl.2} parent=0 // pred_region
    _
  $region29: #{_device_forward_impl.2} parent=0 // pred_fallthru
    _

// kernel: _device_forward_impl.3
$region0: #{_device_forward_impl.3}
  #allocation0 [shape = 'u32[]', space=smem, size = 0x4, offset = 0x4, fixed_abs, tag = 'smem constant byte address 0x4 - core index']
  #allocation1 [shape = 'u32[72,128]{1,0:T(1,128)}', space=vmem, size = 0x9000, scoped, tag = 'internal scratch']
  #allocation2 [shape = 'f32[1,1]{1,0:T(1,128)S(1)}', space=vmem, size = 0x200, scoped, tag = 'scoped memory for _device_forward_impl.3']
  #allocation3 [shape = 'f32[1,1]{1,0:T(1,128)S(1)}', space=vmem, size = 0x200, scoped, tag = 'scoped memory for _device_forward_impl.3']
  #allocation4 [shape = 'f32[1,1]{1,0:T(1,128)S(1)}', space=vmem, size = 0x200, scoped, tag = 'scoped memory for _device_forward_impl.3']
  #allocation5 [shape = 'f32[1,1]{1,0:T(1,128)S(1)}', space=vmem, size = 0x200, scoped, tag = 'scoped memory for _device_forward_impl.3']
  #allocation6 [shape = 'f32[1,1]{1,0:T(1,128)S(1)}', space=vmem, size = 0x200, scoped, tag = 'scoped memory for _device_forward_impl.3']
  %s0 = inlined_call_operand.smem [shape: u32[32], index: -1, kind: input, shape index: {}]
  %s1 = sld [smem:[%s0]]
  %s2 = scalar_lea.smem %s0, 1
  %s3 = sld [smem:[%s2]]
  %s4 = scalar_lea.smem %s0, 2
  %s5 = sld [smem:[%s4]]
  %s6 = scalar_lea.smem %s0, 3
  %s7 = sld [smem:[%s6]]
  %s8 = scalar_lea.smem %s0, 4
  %s9 = sld [smem:[%s8]]
  %s10 = scalar_lea.smem %s0, 5
  %s11 = sld [smem:[%s10]]
  %s12 = scalar_lea.smem %s0, 6
  %s13 = sld [smem:[%s12]]
  %s14 = scalar_lea.smem %s0, 7
  %s15 = sld [smem:[%s14]]
  %s16 = scalar_lea.smem %s0, 8
  %s17 = sld [smem:[%s16]]
  %s18 = scalar_lea.smem %s0, 9
  %s19 = sld [smem:[%s18]]
  %s20 = scalar_lea.smem %s0, 10
  %s21 = sld [smem:[%s20]]
  %s22 = scalar_lea.smem %s0, 11
  %s23 = sld [smem:[%s22]]
  %s24 = scalar_lea.smem %s0, 12
  %s25 = sld [smem:[%s24]]
  %s26 = scalar_lea.smem %s0, 13
  %s27 = sld [smem:[%s26]]
  %s28 = scalar_lea.smem %s0, 14
  %s29 = sld [smem:[%s28]]
  %s30 = scalar_lea.smem %s0, 15
  %s31 = sld [smem:[%s30]]
  %s32 = scalar_lea.smem %s0, 16
  %s33 = sld [smem:[%s32]]
  %s34 = scalar_lea.smem %s0, 17
  %s35 = sld [smem:[%s34]]
  %s36 = scalar_lea.smem %s0, 18
  %s37 = sld [smem:[%s36]]
  %s38 = scalar_lea.smem %s0, 19
  %s39 = sld [smem:[%s38]]
  %s40 = scalar_lea.smem %s0, 20
  %s41 = sld [smem:[%s40]]
  %s42 = scalar_lea.smem %s0, 21
  %s43 = sld [smem:[%s42]]
  %s44 = scalar_lea.smem %s0, 22
  %s45 = sld [smem:[%s44]]
  %s46 = scalar_lea.smem %s0, 23
  %s47 = sld [smem:[%s46]]
  %s48 = scalar_lea.smem %s0, 24
  %s49 = sld [smem:[%s48]]
  %s50 = scalar_lea.smem %s0, 25
  %s51 = sld [smem:[%s50]]
  %s52 = scalar_lea.smem %s0, 26
  %s53 = sld [smem:[%s52]]
  %s54 = scalar_lea.smem %s0, 27
  %s55 = sld [smem:[%s54]]
  %s56 = scalar_lea.smem %s0, 28
  %s57 = sld [smem:[%s56]]
  %s58 = scalar_lea.smem %s0, 29
  %s59 = sld [smem:[%s58]]
  %s60 = scalar_lea.smem %s0, 30
  %s61 = sld [smem:[%s60]]
  %s62 = scalar_lea.smem %s0, 31
  %s63 = sld [smem:[%s62]]
  %64 = xla_tuple %s57, %s59, %s61, %s63
  %s65 = sld [smem:[#allocation0]]
  $region146: #{_device_forward_impl.3} parent=0
    _
  %s67 = ssub.s32 1, %s65
  %s68 = scalar_select 0, %s67, %s65
  %v69 = vstv %s19
  %70 = vst [vmem:[#allocation2] sm:$0x1] %v69
  %v71 = vstv %s27
  %72 = vst [vmem:[#allocation3] sm:$0x1] %v71
  %v73 = vstv %s31
  %74 = vst [vmem:[#allocation4] sm:$0x1] %v73
  %v75 = vstv %s39
  %76 = vst [vmem:[#allocation5] sm:$0x1] %v75
  %v77 = vstv %s55
  %78 = vst [vmem:[#allocation6] sm:$0x1] %v77
  // Predicated region
  $region2: #{_device_forward_impl.3} parent=0 // pred_check
    _
  $region3: #{_device_forward_impl.3} parent=0 // pred_check_branch
    %80 = sbr.rel (0) target = $region5
  $region4: #{_device_forward_impl.3} parent=0 // pred_region
    _
  $region5: #{_device_forward_impl.3} parent=0 // pred_fallthru
    _
  // Predicated region
  $region6: #{_device_forward_impl.3} parent=0 // pred_check
    _
  $region7: #{_device_forward_impl.3} parent=0 // pred_check_branch
    %82 = sbr.rel (0) target = $region9
  $region8: #{_device_forward_impl.3} parent=0 // pred_region
    _
  $region9: #{_device_forward_impl.3} parent=0 // pred_fallthru
    _
  // Predicated region
  $region10: #{_device_forward_impl.3} parent=0 // pred_check
    _
  $region11: #{_device_forward_impl.3} parent=0 // pred_check_branch
    %84 = sbr.rel (0) target = $region13
  $region12: #{_device_forward_impl.3} parent=0 // pred_region
    _
  $region13: #{_device_forward_impl.3} parent=0 // pred_fallthru
    _
  // Predicated region
  $region14: #{_device_forward_impl.3} parent=0 // pred_check
    _
  $region15: #{_device_forward_impl.3} parent=0 // pred_check_branch
    %86 = sbr.rel (0) target = $region17
  $region16: #{_device_forward_impl.3} parent=0 // pred_region
    _
  $region17: #{_device_forward_impl.3} parent=0 // pred_fallthru
    _
  // Predicated region
  $region18: #{_device_forward_impl.3} parent=0 // pred_check
    _
  $region19: #{_device_forward_impl.3} parent=0 // pred_check_branch
    %88 = sbr.rel (0) target = $region21
  $region20: #{_device_forward_impl.3} parent=0 // pred_region
    _
  $region21: #{_device_forward_impl.3} parent=0 // pred_fallthru
    _
  // Predicated region
  $region22: #{_device_forward_impl.3} parent=0 // pred_check
    _
  $region23: #{_device_forward_impl.3} parent=0 // pred_check_branch
    %90 = sbr.rel (0) target = $region25
  $region24: #{_device_forward_impl.3} parent=0 // pred_region
    _
  $region25: #{_device_forward_impl.3} parent=0 // pred_fallthru
    _
  // Predicated region
  $region26: #{_device_forward_impl.3} parent=0 // pred_check
    _
  $region27: #{_device_forward_impl.3} parent=0 // pred_check_branch
    %92 = sbr.rel (0) target = $region29
  $region28: #{_device_forward_impl.3} parent=0 // pred_region
    _
  $region29: #{_device_forward_impl.3} parent=0 // pred_fallthru
    _
  // Predicated region
  $region30: #{_device_forward_impl.3} parent=0 // pred_check
    _
  $region31: #{_device_forward_impl.3} parent=0 // pred_check_branch
    %94 = sbr.rel (0) target = $region33
  $region32: #{_device_forward_impl.3} parent=0 // pred_region
    _
  $region33: #{_device_forward_impl.3} parent=0 // pred_fallthru
    _
  // Predicated region
  $region34: #{_device_forward_impl.3} parent=0 // pred_check
    _
  $region35: #{_device_forward_impl.3} parent=0 // pred_check_branch
    %96 = sbr.rel (0) target = $region37
  $region36: #{_device_forward_impl.3} parent=0 // pred_region
    _
  $region37: #{_device_forward_impl.3} parent=0 // pred_fallthru
    _
  // Predicated region
  $region38: #{_device_forward_impl.3} parent=0 // pred_check
    _
  $region39: #{_device_forward_impl.3} parent=0 // pred_check_branch
    %98 = sbr.rel (0) target = $region41
  $region40: #{_device_forward_impl.3} parent=0 // pred_region
    _
  $region41: #{_device_forward_impl.3} parent=0 // pred_fallthru
    _
  // Predicated region
  $region42: #{_device_forward_impl.3} parent=0 // pred_check
    _
  $region43: #{_device_forward_impl.3} parent=0 // pred_check_branch
    %100 = sbr.rel (0) target = $region45
  $region44: #{_device_forward_impl.3} parent=0 // pred_region
    _
  $region45: #{_device_forward_impl.3} parent=0 // pred_fallthru
    _
  // Predicated region
  $region46: #{_device_forward_impl.3} parent=0 // pred_check
    _
  $region47: #{_device_forward_impl.3} parent=0 // pred_check_branch
    %102 = sbr.rel (0) target = $region49
  $region48: #{_device_forward_impl.3} parent=0 // pred_region
    _
  $region49: #{_device_forward_impl.3} parent=0 // pred_fallthru
    _
  // Predicated region
  $region50: #{_device_forward_impl.3} parent=0 // pred_check
    _
  $region51: #{_device_forward_impl.3} parent=0 // pred_check_branch
    %104 = sbr.rel (0) target = $region53
  $region52: #{_device_forward_impl.3} parent=0 // pred_region
    _
  $region53: #{_device_forward_impl.3} parent=0 // pred_fallthru
    _
  // Predicated region
  $region54: #{_device_forward_impl.3} parent=0 // pred_check
    _
  $region55: #{_device_forward_impl.3} parent=0 // pred_check_branch
    %106 = sbr.rel (0) target = $region57
  $region56: #{_device_forward_impl.3} parent=0 // pred_region
    _
  $region57: #{_device_forward_impl.3} parent=0 // pred_fallthru
    _
  // Predicated region
  $region58: #{_device_forward_impl.3} parent=0 // pred_check
    _
  $region59: #{_device_forward_impl.3} parent=0 // pred_check_branch
    %108 = sbr.rel (0) target = $region61
  $region60: #{_device_forward_impl.3} parent=0 // pred_region
    _
  $region61: #{_device_forward_impl.3} parent=0 // pred_fallthru
    _
  // Predicated region
  $region62: #{_device_forward_impl.3} parent=0 // pred_check
    _
  $region63: #{_device_forward_impl.3} parent=0 // pred_check_branch
    %110 = sbr.rel (0) target = $region65
  $region64: #{_device_forward_impl.3} parent=0 // pred_region
    _
  $region65: #{_device_forward_impl.3} parent=0 // pred_fallthru
    _
  // Predicated region
  $region66: #{_device_forward_impl.3} parent=0 // pred_check
    _
  $region67: #{_device_forward_impl.3} parent=0 // pred_check_branch
    %112 = sbr.rel (0) target = $region69
  $region68: #{_device_forward_impl.3} parent=0 // pred_region
    _
  $region69: #{_device_forward_impl.3} parent=0 // pred_fallthru
    _
  // Predicated region
  $region70: #{_device_forward_impl.3} parent=0 // pred_check
    _
  $region71: #{_device_forward_impl.3} parent=0 // pred_check_branch
    %114 = sbr.rel (0) target = $region73
  $region72: #{_device_forward_impl.3} parent=0 // pred_region
    _
  $region73: #{_device_forward_impl.3} parent=0 // pred_fallthru
    _
  // Predicated region
  $region74: #{_device_forward_impl.3} parent=0 // pred_check
    _
  $region75: #{_device_forward_impl.3} parent=0 // pred_check_branch
    %116 = sbr.rel (0) target = $region77
  $region76: #{_device_forward_impl.3} parent=0 // pred_region
    _
  $region77: #{_device_forward_impl.3} parent=0 // pred_fallthru
    _
  // Predicated region
  $region78: #{_device_forward_impl.3} parent=0 // pred_check
    _
  $region79: #{_device_forward_impl.3} parent=0 // pred_check_branch
    %118 = sbr.rel (0) target = $region81
  $region80: #{_device_forward_impl.3} parent=0 // pred_region
    _
  $region81: #{_device_forward_impl.3} parent=0 // pred_fallthru
    _
  // Predicated region
  $region82: #{_device_forward_impl.3} parent=0 // pred_check
    _
  $region83: #{_device_forward_impl.3} parent=0 // pred_check_branch
    %120 = sbr.rel (0) target = $region85
  $region84: #{_device_forward_impl.3} parent=0 // pred_region
    _
  $region85: #{_device_forward_impl.3} parent=0 // pred_fallthru
    _
  // Predicated region
  $region86: #{_device_forward_impl.3} parent=0 // pred_check
    _
  $region87: #{_device_forward_impl.3} parent=0 // pred_check_branch
    %122 = sbr.rel (0) target = $region89
  $region88: #{_device_forward_impl.3} parent=0 // pred_region
    _
  $region89: #{_device_forward_impl.3} parent=0 // pred_fallthru
    _
  // Predicated region
  $region90: #{_device_forward_impl.3} parent=0 // pred_check
    _
  $region91: #{_device_forward_impl.3} parent=0 // pred_check_branch
    %124 = sbr.rel (0) target = $region93
  $region92: #{_device_forward_impl.3} parent=0 // pred_region
    _
  $region93: #{_device_forward_impl.3} parent=0 // pred_fallthru
    _
  // Predicated region
  $region94: #{_device_forward_impl.3} parent=0 // pred_check
    _
  $region95: #{_device_forward_impl.3} parent=0 // pred_check_branch
    %126 = sbr.rel (0) target = $region97
  $region96: #{_device_forward_impl.3} parent=0 // pred_region
    _
  $region97: #{_device_forward_impl.3} parent=0 // pred_fallthru
    _
  // Predicated region
  $region98: #{_device_forward_impl.3} parent=0 // pred_check
    _
  $region99: #{_device_forward_impl.3} parent=0 // pred_check_branch
    %128 = sbr.rel (0) target = $region101
  $region100: #{_device_forward_impl.3} parent=0 // pred_region
    _
  $region101: #{_device_forward_impl.3} parent=0 // pred_fallthru
    _
  // Predicated region
  $region102: #{_device_forward_impl.3} parent=0 // pred_check
    _
  $region103: #{_device_forward_impl.3} parent=0 // pred_check_branch
    %130 = sbr.rel (0) target = $region105
  $region104: #{_device_forward_impl.3} parent=0 // pred_region
    _
  $region105: #{_device_forward_impl.3} parent=0 // pred_fallthru
    _
  // Predicated region
  $region106: #{_device_forward_impl.3} parent=0 // pred_check
    _
  $region107: #{_device_forward_impl.3} parent=0 // pred_check_branch
    %132 = sbr.rel (0) target = $region109
  $region108: #{_device_forward_impl.3} parent=0 // pred_region
    _
  $region109: #{_device_forward_impl.3} parent=0 // pred_fallthru
    _
  // Predicated region
  $region110: #{_device_forward_impl.3} parent=0 // pred_check
    _
  $region111: #{_device_forward_impl.3} parent=0 // pred_check_branch
    %134 = sbr.rel (0) target = $region113
  $region112: #{_device_forward_impl.3} parent=0 // pred_region
    _
  $region113: #{_device_forward_impl.3} parent=0 // pred_fallthru
    _
  %v135 = vld [vmem:[%s1] sm:$0x7]
  %v136 = vld [vmem:[%s3] sm:$0x7]
  %v137 = vld [vmem:[%s21] sm:$0xff]
  %v138 = vld [vmem:[%s21 + $0x8] sm:$0xff]
  %v139 = vld [vmem:[%s21 + $0x10] sm:$0xff]
  %v140 = vld [vmem:[%s21 + $0x18] sm:$0xff]
  %v141 = vld [vmem:[%s21 + $0x20] sm:$0xff]
  %v142 = vld [vmem:[%s21 + $0x28] sm:$0xff]
  %v143 = vld [vmem:[%s21 + $0x30] sm:$0xff]
  %v144 = vld [vmem:[%s21 + $0x38] sm:$0xff]
  %vm145 = vcmask 261120
  %v147 = vsel %vm145, %v136, 0
  %149 = vmatpush.msra.mxu0 0.0
  %150 = vmatpush.msra.mxu0 0.0
  %151 = vmatpush.msra.mxu0 0.0
  %152 = vmatpush.msra.mxu0 0.0
  %153 = vmatpush.msra.mxu0 0.0
  %154 = vmatpush.msra.mxu0 0.0
  %155 = vmatpush.msra.mxu0 0.0
  %156 = vmatpush.msra.mxu0 0.0
  %157 = vmatpush.msra.mxu0 0.0
  %158 = vmatpush.msra.mxu0 0.0
  %159 = vmatpush.msra.mxu0 0.0
  %160 = vmatpush.msra.mxu0 0.0
  %161 = vmatpush.msra.mxu0 %v144
  %162 = vmatpush.msra.mxu0 %v143
  %163 = vmatpush.msra.mxu0 %v142
  %164 = vmatpush.msra.mxu0 %v141
  %165 = vmatmul.f32.gmra.mxu0 %v147
  %v166 = vpop.f32.mrf.mxu0
  %v167 = vadd.f32 0.0, %v166
  %168 = vdwg.mxu0
  %v170 = vsel %vm145, %v135, 0
  %172 = vmatpush.msra.mxu0 0.0
  %173 = vmatpush.msra.mxu0 0.0
  %174 = vmatpush.msra.mxu0 0.0
  %175 = vmatpush.msra.mxu0 0.0
  %176 = vmatpush.msra.mxu0 0.0
  %177 = vmatpush.msra.mxu0 0.0
  %178 = vmatpush.msra.mxu0 0.0
  %179 = vmatpush.msra.mxu0 0.0
  %180 = vmatpush.msra.mxu0 0.0
  %181 = vmatpush.msra.mxu0 0.0
  %182 = vmatpush.msra.mxu0 0.0
  %183 = vmatpush.msra.mxu0 0.0
  %184 = vmatpush.msra.mxu0 %v140
  %185 = vmatpush.msra.mxu0 %v139
  %186 = vmatpush.msra.mxu0 %v138
  %187 = vmatpush.msra.mxu0 %v137
  %188 = vmatmul.f32.gmra.mxu0 %v170
  %v189 = vpop.f32.mrf.mxu0
  %v190 = vadd.f32 %v167, %v189
  %191 = vdwg.mxu0
  %v192 = vld [vmem:[%s23] sm:$0x1]
  %v194 = vperm.slane %v192, 0
  %v196 = vadd.f32 %v190, %v194
  %v197 = vtanh.pop %v196
  %v198 = vld [vmem:[%s25] sm:$0xff]
  %v199 = vld [vmem:[%s25 + $0x8] sm:$0xff]
  %v200 = vld [vmem:[%s25 + $0x10] sm:$0xff]
  %v201 = vld [vmem:[%s25 + $0x18] sm:$0xff]
  %v202 = vld [vmem:[#allocation3] sm:$0x1]
  %v204 = vperm.slane %v202, 0
  %v207 = vsel %vm145, %v197, 0
  %209 = vmatpush.msra.mxu0 0.0
  %210 = vmatpush.msra.mxu0 0.0
  %211 = vmatpush.msra.mxu0 0.0
  %212 = vmatpush.msra.mxu0 0.0
  %213 = vmatpush.msra.mxu0 0.0
  %214 = vmatpush.msra.mxu0 0.0
  %215 = vmatpush.msra.mxu0 0.0
  %216 = vmatpush.msra.mxu0 0.0
  %217 = vmatpush.msra.mxu0 0.0
  %218 = vmatpush.msra.mxu0 0.0
  %219 = vmatpush.msra.mxu0 0.0
  %220 = vmatpush.msra.mxu0 0.0
  %221 = vmatpush.msra.mxu0 %v201
  %222 = vmatpush.msra.mxu0 %v200
  %223 = vmatpush.msra.mxu0 %v199
  %224 = vmatpush.msra.mxu0 %v198
  %225 = vmatmul.f32.gmra.mxu0 %v207
  %v226 = vpop.f32.mrf.mxu0
  %v227 = vadd.f32 %v204, %v226
  %228 = vdwg.mxu0
  %vm229 = vcmask 2048
  %230 = vst.msk [vmem:[%s57] sm:$0x7] %vm229, %v227
  %v231 = vld [vmem:[%s29] sm:$0xff]
  %v232 = vld [vmem:[%s29 + $0x8] sm:$0xff]
  %v233 = vld [vmem:[%s29 + $0x10] sm:$0xff]
  %v234 = vld [vmem:[%s29 + $0x18] sm:$0xff]
  %v235 = vld [vmem:[%s29 + $0x20] sm:$0xff]
  %v236 = vld [vmem:[%s29 + $0x28] sm:$0xff]
  %v237 = vld [vmem:[%s29 + $0x30] sm:$0xff]
  %v238 = vld [vmem:[%s29 + $0x38] sm:$0xff]
  %239 = vmatpush.msra.mxu0 0.0
  %240 = vmatpush.msra.mxu0 0.0
  %241 = vmatpush.msra.mxu0 0.0
  %242 = vmatpush.msra.mxu0 0.0
  %243 = vmatpush.msra.mxu0 0.0
  %244 = vmatpush.msra.mxu0 0.0
  %245 = vmatpush.msra.mxu0 0.0
  %246 = vmatpush.msra.mxu0 0.0
  %247 = vmatpush.msra.mxu0 0.0
  %248 = vmatpush.msra.mxu0 0.0
  %249 = vmatpush.msra.mxu0 0.0
  %250 = vmatpush.msra.mxu0 0.0
  %251 = vmatpush.msra.mxu0 %v238
  %252 = vmatpush.msra.mxu0 %v237
  %253 = vmatpush.msra.mxu0 %v236
  %254 = vmatpush.msra.mxu0 %v235
  %255 = vmatmul.f32.gmra.mxu0 %v147
  %v256 = vpop.f32.mrf.mxu0
  %v257 = vadd.f32 0.0, %v256
  %258 = vdwg.mxu0
  %259 = vmatpush.msra.mxu0 0.0
  %260 = vmatpush.msra.mxu0 0.0
  %261 = vmatpush.msra.mxu0 0.0
  %262 = vmatpush.msra.mxu0 0.0
  %263 = vmatpush.msra.mxu0 0.0
  %264 = vmatpush.msra.mxu0 0.0
  %265 = vmatpush.msra.mxu0 0.0
  %266 = vmatpush.msra.mxu0 0.0
  %267 = vmatpush.msra.mxu0 0.0
  %268 = vmatpush.msra.mxu0 0.0
  %269 = vmatpush.msra.mxu0 0.0
  %270 = vmatpush.msra.mxu0 0.0
  %271 = vmatpush.msra.mxu0 %v234
  %272 = vmatpush.msra.mxu0 %v233
  %273 = vmatpush.msra.mxu0 %v232
  %274 = vmatpush.msra.mxu0 %v231
  %275 = vmatmul.f32.gmra.mxu0 %v170
  %v276 = vpop.f32.mrf.mxu0
  %v277 = vadd.f32 %v257, %v276
  %278 = vdwg.mxu0
  %v279 = vld [vmem:[#allocation4] sm:$0x1]
  %v281 = vperm.slane %v279, 0
  %v283 = vadd.f32 %v277, %v281
  %284 = vst.msk [vmem:[%s59] sm:$0x7] %vm229, %v283
  %v285 = vld [vmem:[%s11] sm:$0x7]
  %v286 = vld [vmem:[%s11 + $0x4] sm:$0x7]
  %v287 = vld [vmem:[%s11 + $0x8] sm:$0x7]
  %v288 = vld [vmem:[%s11 + $0xc] sm:$0x7]
  %v289 = vld [vmem:[%s17] sm:$0x1]
  %v291 = vperm.slane %v289, 0
  %v293 = vmul.f32 %v285, %v291
  %v294 = vmul.f32 %v286, %v291
  %v295 = vmul.f32 %v287, %v291
  %v296 = vmul.f32 %v288, %v291
  %vm297 = vcmask 256000
  %v298 = vsel %vm297, %v293, 0.0
  %299 = vadd.xlane.f32.xlu0 %v298
  %v300 = vpop.xlane.xlu0 %299
  %v301 = vsel %vm297, %v294, 0.0
  %302 = vadd.xlane.f32.xlu0 %v301
  %v303 = vpop.xlane.xlu0 %302
  %v304 = vsel %vm297, %v295, 0.0
  %305 = vadd.xlane.f32.xlu0 %v304
  %v306 = vpop.xlane.xlu0 %305
  %v307 = vsel %vm297, %v296, 0.0
  %308 = vadd.xlane.f32.xlu0 %v307
  %v309 = vpop.xlane.xlu0 %308
  %v310 = vld [vmem:[#allocation2] sm:$0x1]
  %v312 = vperm.slane %v310, 0
  %313 = vset.pattern.permute.xlu0 0
  %314 = vperm.xlu0 %313, %v312
  %v315 = vpop.permute.xlu0 %314
  %v317 = vadd.f32 %v300, %v315
  %v318 = vadd.f32 %v303, %v315
  %v319 = vadd.f32 %v306, %v315
  %v320 = vadd.f32 %v309, %v315
  %v321 = vld [vmem:[%s13] sm:$0xf]
  %vm322 = vcmp.gt.f32.partialorder %v321, 0.0
  %v323 = vsel %vm322, 0.0, -1e+30
  %v325 = vperm.slane %v323, 0
  %v326 = vlaneseq
  %v327 = vshrl.u32 %v326, 7
  %329 = vset.pattern.permute.xlu0 %v327
  %330 = vperm.xlu0 %329, %v325
  %v331 = vpop.permute.xlu0 %330
  %v332 = vperm.slane %v323, 1
  %v333 = vlaneseq
  %v334 = vshrl.u32 %v333, 7
  %336 = vset.pattern.permute.xlu0 %v334
  %337 = vperm.xlu0 %336, %v332
  %v338 = vpop.permute.xlu0 %337
  %v339 = vperm.slane %v323, 2
  %v340 = vlaneseq
  %v341 = vshrl.u32 %v340, 7
  %343 = vset.pattern.permute.xlu0 %v341
  %344 = vperm.xlu0 %343, %v339
  %v345 = vpop.permute.xlu0 %344
  %v346 = vperm.slane %v323, 3
  %v347 = vlaneseq
  %v348 = vshrl.u32 %v347, 7
  %350 = vset.pattern.permute.xlu0 %v348
  %351 = vperm.xlu0 %350, %v346
  %v352 = vpop.permute.xlu0 %351
  %v357 = vadd.f32 %v317, %v331
  %v358 = vadd.f32 %v318, %v338
  %v359 = vadd.f32 %v319, %v345
  %v360 = vadd.f32 %v320, %v352
  %365 = vset.pattern.permute.xlu0 0
  %366 = vperm.xlu0 %365, %v357
  %v367 = vpop.permute.xlu0 %366
  %368 = vset.pattern.permute.xlu0 0
  %369 = vperm.xlu0 %368, %v358
  %v370 = vpop.permute.xlu0 %369
  %371 = vset.pattern.permute.xlu0 0
  %372 = vperm.xlu0 %371, %v359
  %v373 = vpop.permute.xlu0 %372
  %374 = vset.pattern.permute.xlu0 0
  %375 = vperm.xlu0 %374, %v360
  %v376 = vpop.permute.xlu0 %375
  %v377 = vlaneseq
  %v378 = vand.u32 %v377, 127
  %v379 = vperm.slane %v367, %v378
  %v380 = vperm.slane %v370, %v378
  %v381 = vperm.slane %v373, %v378
  %v382 = vperm.slane %v376, %v378
  %vm383 = vcmask 1041409
  %v384 = vsel %vm383, %v380, %v379
  %vm385 = vcmask 1042434
  %v386 = vsel %vm385, %v381, %v384
  %vm387 = vcmask 1043459
  %v388 = vsel %vm387, %v382, %v386
  %vm390 = vcmask 19456
  %v391 = vsel %vm390, %v388, -inf
  %392 = vmax.xlane.f32.xlu0 %v391
  %v393 = vpop.xlane.xlu0 %392
  %v395 = vperm.slane %v393, 0
  %v396 = vperm.slane %v393, 1
  %v397 = vperm.slane %v393, 2
  %v398 = vperm.slane %v393, 3
  %v403 = vsub.f32 %v357, %v395
  %v404 = vsub.f32 %v358, %v396
  %v405 = vsub.f32 %v359, %v397
  %v406 = vsub.f32 %v360, %v398
  %v407 = vmul.f32 %v403, 1.442695
  %v408 = vpow.pop %v407
  %v409 = vmul.f32 %v404, 1.442695
  %v410 = vpow.pop %v409
  %v411 = vmul.f32 %v405, 1.442695
  %v412 = vpow.pop %v411
  %v413 = vmul.f32 %v406, 1.442695
  %v414 = vpow.pop %v413
  %419 = vset.pattern.permute.xlu0 0
  %420 = vperm.xlu0 %419, %v408
  %v421 = vpop.permute.xlu0 %420
  %422 = vset.pattern.permute.xlu0 0
  %423 = vperm.xlu0 %422, %v410
  %v424 = vpop.permute.xlu0 %423
  %425 = vset.pattern.permute.xlu0 0
  %426 = vperm.xlu0 %425, %v412
  %v427 = vpop.permute.xlu0 %426
  %428 = vset.pattern.permute.xlu0 0
  %429 = vperm.xlu0 %428, %v414
  %v430 = vpop.permute.xlu0 %429
  %v431 = vperm.slane %v421, %v378
  %v432 = vperm.slane %v424, %v378
  %v433 = vperm.slane %v427, %v378
  %v434 = vperm.slane %v430, %v378
  %v435 = vsel %vm383, %v432, %v431
  %v436 = vsel %vm385, %v433, %v435
  %v437 = vsel %vm387, %v434, %v436
  %v439 = vsel %vm390, %v437, 0.0
  %440 = vadd.xlane.f32.xlu0 %v439
  %v441 = vpop.xlane.xlu0 %440
  %v442 = vrcp.pop %v441
  %v444 = vperm.slane %v442, 0
  %v445 = vperm.slane %v442, 1
  %v446 = vperm.slane %v442, 2
  %v447 = vperm.slane %v442, 3
  %v452 = vmul.f32 %v408, %v444
  %v453 = vmul.f32 %v410, %v445
  %v454 = vmul.f32 %v412, %v446
  %v455 = vmul.f32 %v414, %v447
  %457 = vset.pattern.permute.xlu0 0
  %458 = vperm.xlu0 %457, %v452
  %v459 = vpop.permute.xlu0 %458
  %462 = vset.pattern.permute.xlu0 0
  %463 = vperm.xlu0 %462, %v453
  %v464 = vpop.permute.xlu0 %463
  %467 = vset.pattern.permute.xlu0 0
  %468 = vperm.xlu0 %467, %v454
  %v469 = vpop.permute.xlu0 %468
  %472 = vset.pattern.permute.xlu0 0
  %473 = vperm.xlu0 %472, %v455
  %v474 = vpop.permute.xlu0 %473
  %v476 = vmul.f32 %v285, %v459
  %v477 = vmul.f32 %v286, %v464
  %v478 = vmul.f32 %v287, %v469
  %v479 = vmul.f32 %v288, %v474
  %v480 = vsel %vm297, %v476, 0.0
  %v481 = vrot.slane %v480, 4
  %v482 = vadd.f32 %v480, %v481
  %v483 = vrot.slane %v482, 2
  %v484 = vadd.f32 %v482, %v483
  %v485 = vrot.slane %v484, 1
  %v486 = vadd.f32 %v484, %v485
  %v487 = vsel %vm297, %v477, 0.0
  %v488 = vrot.slane %v487, 4
  %v489 = vadd.f32 %v487, %v488
  %v490 = vrot.slane %v489, 2
  %v491 = vadd.f32 %v489, %v490
  %v492 = vrot.slane %v491, 1
  %v493 = vadd.f32 %v491, %v492
  %v494 = vsel %vm297, %v478, 0.0
  %v495 = vrot.slane %v494, 4
  %v496 = vadd.f32 %v494, %v495
  %v497 = vrot.slane %v496, 2
  %v498 = vadd.f32 %v496, %v497
  %v499 = vrot.slane %v498, 1
  %v500 = vadd.f32 %v498, %v499
  %v501 = vsel %vm297, %v479, 0.0
  %v502 = vrot.slane %v501, 4
  %v503 = vadd.f32 %v501, %v502
  %v504 = vrot.slane %v503, 2
  %v505 = vadd.f32 %v503, %v504
  %v506 = vrot.slane %v505, 1
  %v507 = vadd.f32 %v505, %v506
  %v508 = vld [vmem:[%s5] sm:$0xf]
  %v509 = vld [vmem:[%s7] sm:$0xf]
  %v510 = vld [vmem:[%s9] sm:$0xf]
  %v511 = vld [vmem:[%s33] sm:$0xff]
  %v512 = vld [vmem:[%s33 + $0x8] sm:$0xff]
  %v513 = vld [vmem:[%s33 + $0x10] sm:$0xff]
  %v514 = vld [vmem:[%s33 + $0x18] sm:$0xff]
  %v515 = vld [vmem:[%s33 + $0x20] sm:$0xff]
  %v516 = vld [vmem:[%s33 + $0x28] sm:$0xff]
  %v517 = vld [vmem:[%s33 + $0x30] sm:$0xff]
  %v518 = vld [vmem:[%s33 + $0x38] sm:$0xff]
  %v520 = vsel %vm145, %v509, 0
  %522 = vmatpush.msra.mxu0 0.0
  %523 = vmatpush.msra.mxu0 0.0
  %524 = vmatpush.msra.mxu0 0.0
  %525 = vmatpush.msra.mxu0 0.0
  %526 = vmatpush.msra.mxu0 0.0
  %527 = vmatpush.msra.mxu0 0.0
  %528 = vmatpush.msra.mxu0 0.0
  %529 = vmatpush.msra.mxu0 0.0
  %530 = vmatpush.msra.mxu0 0.0
  %531 = vmatpush.msra.mxu0 0.0
  %532 = vmatpush.msra.mxu0 0.0
  %533 = vmatpush.msra.mxu0 0.0
  %534 = vmatpush.msra.mxu0 %v518
  %535 = vmatpush.msra.mxu0 %v517
  %536 = vmatpush.msra.mxu0 %v516
  %537 = vmatpush.msra.mxu0 %v515
  %538 = vmatmul.f32.gmra.mxu0 %v520
  %v539 = vpop.f32.mrf.mxu0
  %v540 = vadd.f32 0.0, %v539
  %541 = vdwg.mxu0
  %v543 = vsel %vm145, %v508, 0
  %545 = vmatpush.msra.mxu0 0.0
  %546 = vmatpush.msra.mxu0 0.0
  %547 = vmatpush.msra.mxu0 0.0
  %548 = vmatpush.msra.mxu0 0.0
  %549 = vmatpush.msra.mxu0 0.0
  %550 = vmatpush.msra.mxu0 0.0
  %551 = vmatpush.msra.mxu0 0.0
  %552 = vmatpush.msra.mxu0 0.0
  %553 = vmatpush.msra.mxu0 0.0
  %554 = vmatpush.msra.mxu0 0.0
  %555 = vmatpush.msra.mxu0 0.0
  %556 = vmatpush.msra.mxu0 0.0
  %557 = vmatpush.msra.mxu0 %v514
  %558 = vmatpush.msra.mxu0 %v513
  %559 = vmatpush.msra.mxu0 %v512
  %560 = vmatpush.msra.mxu0 %v511
  %561 = vmatmul.f32.gmra.mxu0 %v543
  %v562 = vpop.f32.mrf.mxu0
  %v563 = vadd.f32 %v540, %v562
  %564 = vdwg.mxu0
  %v565 = vld [vmem:[%s33 + $0x40] sm:$0xff]
  %vm566 = vcmask 64512
  %v568 = vsel %vm566, %v510, 0
  %570 = vmatpush.msra.mxu0 0.0
  %571 = vmatpush.msra.mxu0 0.0
  %572 = vmatpush.msra.mxu0 0.0
  %573 = vmatpush.msra.mxu0 0.0
  %574 = vmatpush.msra.mxu0 0.0
  %575 = vmatpush.msra.mxu0 0.0
  %576 = vmatpush.msra.mxu0 0.0
  %577 = vmatpush.msra.mxu0 0.0
  %578 = vmatpush.msra.mxu0 0.0
  %579 = vmatpush.msra.mxu0 0.0
  %580 = vmatpush.msra.mxu0 0.0
  %581 = vmatpush.msra.mxu0 0.0
  %582 = vmatpush.msra.mxu0 0.0
  %583 = vmatpush.msra.mxu0 0.0
  %584 = vmatpush.msra.mxu0 0.0
  %585 = vmatpush.msra.mxu0 %v565
  %586 = vmatmul.f32.gmra.mxu0 %v568
  %v587 = vpop.f32.mrf.mxu0
  %v588 = vadd.f32 0.0, %v587
  %589 = vdwg.mxu0
  %v590 = vadd.f32 %v563, %v588
  %v591 = vld [vmem:[%s33 + $0x48] sm:$0xff]
  %v592 = vld [vmem:[%s33 + $0x50] sm:$0xff]
  %v593 = vld [vmem:[%s33 + $0x58] sm:$0xff]
  %v594 = vld [vmem:[%s33 + $0x60] sm:$0xff]
  %v599 = vsel %vm383, %v493, %v486
  %v600 = vsel %vm385, %v500, %v599
  %v601 = vsel %vm387, %v507, %v600
  %v602 = vsel %vm145, %v601, 0
  %604 = vmatpush.msra.mxu0 0.0
  %605 = vmatpush.msra.mxu0 0.0
  %606 = vmatpush.msra.mxu0 0.0
  %607 = vmatpush.msra.mxu0 0.0
  %608 = vmatpush.msra.mxu0 0.0
  %609 = vmatpush.msra.mxu0 0.0
  %610 = vmatpush.msra.mxu0 0.0
  %611 = vmatpush.msra.mxu0 0.0
  %612 = vmatpush.msra.mxu0 0.0
  %613 = vmatpush.msra.mxu0 0.0
  %614 = vmatpush.msra.mxu0 0.0
  %615 = vmatpush.msra.mxu0 0.0
  %616 = vmatpush.msra.mxu0 %v594
  %617 = vmatpush.msra.mxu0 %v593
  %618 = vmatpush.msra.mxu0 %v592
  %619 = vmatpush.msra.mxu0 %v591
  %620 = vmatmul.f32.gmra.mxu0 %v602
  %v621 = vpop.f32.mrf.mxu0
  %v622 = vadd.f32 0.0, %v621
  %623 = vdwg.mxu0
  %v624 = vadd.f32 %v590, %v622
  %v625 = vld [vmem:[%s35] sm:$0x1]
  %v627 = vperm.slane %v625, 0
  %v629 = vadd.f32 %v624, %v627
  %v630 = vtanh.pop %v629
  %v631 = vld [vmem:[%s37] sm:$0xff]
  %v632 = vld [vmem:[%s37 + $0x8] sm:$0xff]
  %v633 = vld [vmem:[%s37 + $0x10] sm:$0xff]
  %v634 = vld [vmem:[%s37 + $0x18] sm:$0xff]
  %v635 = vld [vmem:[#allocation5] sm:$0x1]
  %v637 = vperm.slane %v635, 0
  %v640 = vsel %vm145, %v630, 0
  %642 = vmatpush.msra.mxu0 0.0
  %643 = vmatpush.msra.mxu0 0.0
  %644 = vmatpush.msra.mxu0 0.0
  %645 = vmatpush.msra.mxu0 0.0
  %646 = vmatpush.msra.mxu0 0.0
  %647 = vmatpush.msra.mxu0 0.0
  %648 = vmatpush.msra.mxu0 0.0
  %649 = vmatpush.msra.mxu0 0.0
  %650 = vmatpush.msra.mxu0 0.0
  %651 = vmatpush.msra.mxu0 0.0
  %652 = vmatpush.msra.mxu0 0.0
  %653 = vmatpush.msra.mxu0 0.0
  %654 = vmatpush.msra.mxu0 %v634
  %655 = vmatpush.msra.mxu0 %v633
  %656 = vmatpush.msra.mxu0 %v632
  %657 = vmatpush.msra.mxu0 %v631
  %658 = vmatmul.f32.gmra.mxu0 %v640
  %v659 = vpop.f32.mrf.mxu0
  %v660 = vadd.f32 %v637, %v659
  %661 = vdwg.mxu0
  %vm662 = vcmask 3072
  %663 = vst.msk [vmem:[%s61] sm:$0xf] %vm662, %v660
  %v664 = vld [vmem:[%s41] sm:$0xff]
  %v665 = vld [vmem:[%s41 + $0x8] sm:$0xff]
  %v666 = vld [vmem:[%s41 + $0x10] sm:$0xff]
  %v667 = vld [vmem:[%s41 + $0x18] sm:$0xff]
  %v668 = vld [vmem:[%s41 + $0x20] sm:$0xff]
  %v669 = vld [vmem:[%s41 + $0x28] sm:$0xff]
  %v670 = vld [vmem:[%s41 + $0x30] sm:$0xff]
  %v671 = vld [vmem:[%s41 + $0x38] sm:$0xff]
  %672 = vmatpush.msra.mxu0 0.0
  %673 = vmatpush.msra.mxu0 0.0
  %674 = vmatpush.msra.mxu0 0.0
  %675 = vmatpush.msra.mxu0 0.0
  %676 = vmatpush.msra.mxu0 0.0
  %677 = vmatpush.msra.mxu0 0.0
  %678 = vmatpush.msra.mxu0 0.0
  %679 = vmatpush.msra.mxu0 0.0
  %680 = vmatpush.msra.mxu0 0.0
  %681 = vmatpush.msra.mxu0 0.0
  %682 = vmatpush.msra.mxu0 0.0
  %683 = vmatpush.msra.mxu0 0.0
  %684 = vmatpush.msra.mxu0 %v671
  %685 = vmatpush.msra.mxu0 %v670
  %686 = vmatpush.msra.mxu0 %v669
  %687 = vmatpush.msra.mxu0 %v668
  %688 = vmatmul.f32.gmra.mxu0 %v147
  %v689 = vpop.f32.mrf.mxu0
  %v690 = vadd.f32 0.0, %v689
  %691 = vdwg.mxu0
  %692 = vmatpush.msra.mxu0 0.0
  %693 = vmatpush.msra.mxu0 0.0
  %694 = vmatpush.msra.mxu0 0.0
  %695 = vmatpush.msra.mxu0 0.0
  %696 = vmatpush.msra.mxu0 0.0
  %697 = vmatpush.msra.mxu0 0.0
  %698 = vmatpush.msra.mxu0 0.0
  %699 = vmatpush.msra.mxu0 0.0
  %700 = vmatpush.msra.mxu0 0.0
  %701 = vmatpush.msra.mxu0 0.0
  %702 = vmatpush.msra.mxu0 0.0
  %703 = vmatpush.msra.mxu0 0.0
  %704 = vmatpush.msra.mxu0 %v667
  %705 = vmatpush.msra.mxu0 %v666
  %706 = vmatpush.msra.mxu0 %v665
  %707 = vmatpush.msra.mxu0 %v664
  %708 = vmatmul.f32.gmra.mxu0 %v170
  %v709 = vpop.f32.mrf.mxu0
  %v710 = vadd.f32 %v690, %v709
  %711 = vdwg.mxu0
  %v712 = vld [vmem:[%s43] sm:$0x1]
  %v714 = vperm.slane %v712, 0
  %v716 = vadd.f32 %v710, %v714
  %v717 = vld [vmem:[%s45] sm:$0xff]
  %v718 = vld [vmem:[%s45 + $0x8] sm:$0xff]
  %v719 = vld [vmem:[%s45 + $0x10] sm:$0xff]
  %v720 = vld [vmem:[%s45 + $0x18] sm:$0xff]
  %v721 = vld [vmem:[%s45 + $0x20] sm:$0xff]
  %v722 = vld [vmem:[%s45 + $0x28] sm:$0xff]
  %v723 = vld [vmem:[%s45 + $0x30] sm:$0xff]
  %v724 = vld [vmem:[%s45 + $0x38] sm:$0xff]
  %725 = vmatpush.msra.mxu0 0.0
  %726 = vmatpush.msra.mxu0 0.0
  %727 = vmatpush.msra.mxu0 0.0
  %728 = vmatpush.msra.mxu0 0.0
  %729 = vmatpush.msra.mxu0 0.0
  %730 = vmatpush.msra.mxu0 0.0
  %731 = vmatpush.msra.mxu0 0.0
  %732 = vmatpush.msra.mxu0 0.0
  %733 = vmatpush.msra.mxu0 0.0
  %734 = vmatpush.msra.mxu0 0.0
  %735 = vmatpush.msra.mxu0 0.0
  %736 = vmatpush.msra.mxu0 0.0
  %737 = vmatpush.msra.mxu0 %v724
  %738 = vmatpush.msra.mxu0 %v723
  %739 = vmatpush.msra.mxu0 %v722
  %740 = vmatpush.msra.mxu0 %v721
  %741 = vmatmul.f32.gmra.mxu0 %v520
  %v742 = vpop.f32.mrf.mxu0
  %v743 = vadd.f32 0.0, %v742
  %744 = vdwg.mxu0
  %745 = vmatpush.msra.mxu0 0.0
  %746 = vmatpush.msra.mxu0 0.0
  %747 = vmatpush.msra.mxu0 0.0
  %748 = vmatpush.msra.mxu0 0.0
  %749 = vmatpush.msra.mxu0 0.0
  %750 = vmatpush.msra.mxu0 0.0
  %751 = vmatpush.msra.mxu0 0.0
  %752 = vmatpush.msra.mxu0 0.0
  %753 = vmatpush.msra.mxu0 0.0
  %754 = vmatpush.msra.mxu0 0.0
  %755 = vmatpush.msra.mxu0 0.0
  %756 = vmatpush.msra.mxu0 0.0
  %757 = vmatpush.msra.mxu0 %v720
  %758 = vmatpush.msra.mxu0 %v719
  %759 = vmatpush.msra.mxu0 %v718
  %760 = vmatpush.msra.mxu0 %v717
  %761 = vmatmul.f32.gmra.mxu0 %v543
  %v762 = vpop.f32.mrf.mxu0
  %v763 = vadd.f32 %v743, %v762
  %764 = vdwg.mxu0
  %v765 = vld [vmem:[%s45 + $0x40] sm:$0xff]
  %766 = vmatpush.msra.mxu0 0.0
  %767 = vmatpush.msra.mxu0 0.0
  %768 = vmatpush.msra.mxu0 0.0
  %769 = vmatpush.msra.mxu0 0.0
  %770 = vmatpush.msra.mxu0 0.0
  %771 = vmatpush.msra.mxu0 0.0
  %772 = vmatpush.msra.mxu0 0.0
  %773 = vmatpush.msra.mxu0 0.0
  %774 = vmatpush.msra.mxu0 0.0
  %775 = vmatpush.msra.mxu0 0.0
  %776 = vmatpush.msra.mxu0 0.0
  %777 = vmatpush.msra.mxu0 0.0
  %778 = vmatpush.msra.mxu0 0.0
  %779 = vmatpush.msra.mxu0 0.0
  %780 = vmatpush.msra.mxu0 0.0
  %781 = vmatpush.msra.mxu0 %v765
  %782 = vmatmul.f32.gmra.mxu0 %v568
  %v783 = vpop.f32.mrf.mxu0
  %v784 = vadd.f32 0.0, %v783
  %785 = vdwg.mxu0
  %v786 = vadd.f32 %v763, %v784
  %v787 = vld [vmem:[%s45 + $0x48] sm:$0xff]
  %v788 = vld [vmem:[%s45 + $0x50] sm:$0xff]
  %v789 = vld [vmem:[%s45 + $0x58] sm:$0xff]
  %v790 = vld [vmem:[%s45 + $0x60] sm:$0xff]
  %791 = vmatpush.msra.mxu0 0.0
  %792 = vmatpush.msra.mxu0 0.0
  %793 = vmatpush.msra.mxu0 0.0
  %794 = vmatpush.msra.mxu0 0.0
  %795 = vmatpush.msra.mxu0 0.0
  %796 = vmatpush.msra.mxu0 0.0
  %797 = vmatpush.msra.mxu0 0.0
  %798 = vmatpush.msra.mxu0 0.0
  %799 = vmatpush.msra.mxu0 0.0
  %800 = vmatpush.msra.mxu0 0.0
  %801 = vmatpush.msra.mxu0 0.0
  %802 = vmatpush.msra.mxu0 0.0
  %803 = vmatpush.msra.mxu0 %v790
  %804 = vmatpush.msra.mxu0 %v789
  %805 = vmatpush.msra.mxu0 %v788
  %806 = vmatpush.msra.mxu0 %v787
  %807 = vmatmul.f32.gmra.mxu0 %v602
  %v808 = vpop.f32.mrf.mxu0
  %v809 = vadd.f32 0.0, %v808
  %810 = vdwg.mxu0
  %v811 = vadd.f32 %v786, %v809
  %v812 = vld [vmem:[%s47] sm:$0x1]
  %v814 = vperm.slane %v812, 0
  %v816 = vadd.f32 %v811, %v814
  %v818 = vrot.slane %v716, 1
  %v819 = vrot.slane %v716, 2
  %v820 = vperm.slane %v716, 0
  %v821 = vperm.slane %v818, 0
  %v822 = vperm.slane %v819, 0
  %v826 = vadd.f32 %v820, %v816
  %v827 = vadd.f32 %v821, %v816
  %v828 = vadd.f32 %v822, %v816
  %v829 = vld [vmem:[%s15] sm:$0xf]
  %v830 = vld [vmem:[%s15 + $0x4] sm:$0xf]
  %v831 = vld [vmem:[%s15 + $0x8] sm:$0xf]
  %v832 = vadd.f32 %v826, %v829
  %v833 = vadd.f32 %v827, %v830
  %v834 = vadd.f32 %v828, %v831
  %v835 = vtanh.pop %v832
  %v836 = vtanh.pop %v833
  %v837 = vtanh.pop %v834
  %v838 = vld [vmem:[%s49] sm:$0xff]
  %v839 = vld [vmem:[%s49 + $0x8] sm:$0xff]
  %v840 = vld [vmem:[%s49 + $0x10] sm:$0xff]
  %v841 = vld [vmem:[%s49 + $0x18] sm:$0xff]
  %v842 = vld [vmem:[%s51] sm:$0x1]
  %v844 = vperm.slane %v842, 0
  %v847 = vsel %vm145, %v835, 0
  %849 = vmatpush.msra.mxu0 0.0
  %850 = vmatpush.msra.mxu0 0.0
  %851 = vmatpush.msra.mxu0 0.0
  %852 = vmatpush.msra.mxu0 0.0
  %853 = vmatpush.msra.mxu0 0.0
  %854 = vmatpush.msra.mxu0 0.0
  %855 = vmatpush.msra.mxu0 0.0
  %856 = vmatpush.msra.mxu0 0.0
  %857 = vmatpush.msra.mxu0 0.0
  %858 = vmatpush.msra.mxu0 0.0
  %859 = vmatpush.msra.mxu0 0.0
  %860 = vmatpush.msra.mxu0 0.0
  %861 = vmatpush.msra.mxu0 %v841
  %862 = vmatpush.msra.mxu0 %v840
  %863 = vmatpush.msra.mxu0 %v839
  %864 = vmatpush.msra.mxu0 %v838
  %865 = vmatmul.f32.gmra.mxu0 %v847
  %v866 = vpop.f32.mrf.mxu0
  %v867 = vadd.f32 %v844, %v866
  %868 = vdwg.mxu0
  %v870 = vsel %vm145, %v836, 0
  %872 = vmatpush.msra.mxu0 0.0
  %873 = vmatpush.msra.mxu0 0.0
  %874 = vmatpush.msra.mxu0 0.0
  %875 = vmatpush.msra.mxu0 0.0
  %876 = vmatpush.msra.mxu0 0.0
  %877 = vmatpush.msra.mxu0 0.0
  %878 = vmatpush.msra.mxu0 0.0
  %879 = vmatpush.msra.mxu0 0.0
  %880 = vmatpush.msra.mxu0 0.0
  %881 = vmatpush.msra.mxu0 0.0
  %882 = vmatpush.msra.mxu0 0.0
  %883 = vmatpush.msra.mxu0 0.0
  %884 = vmatpush.msra.mxu0 %v841
  %885 = vmatpush.msra.mxu0 %v840
  %886 = vmatpush.msra.mxu0 %v839
  %887 = vmatpush.msra.mxu0 %v838
  %888 = vmatmul.f32.gmra.mxu0 %v870
  %v889 = vpop.f32.mrf.mxu0
  %v890 = vadd.f32 %v844, %v889
  %891 = vdwg.mxu0
  %v893 = vsel %vm145, %v837, 0
  %895 = vmatpush.msra.mxu0 0.0
  %896 = vmatpush.msra.mxu0 0.0
  %897 = vmatpush.msra.mxu0 0.0
  %898 = vmatpush.msra.mxu0 0.0
  %899 = vmatpush.msra.mxu0 0.0
  %900 = vmatpush.msra.mxu0 0.0
  %901 = vmatpush.msra.mxu0 0.0
  %902 = vmatpush.msra.mxu0 0.0
  %903 = vmatpush.msra.mxu0 0.0
  %904 = vmatpush.msra.mxu0 0.0
  %905 = vmatpush.msra.mxu0 0.0
  %906 = vmatpush.msra.mxu0 0.0
  %907 = vmatpush.msra.mxu0 %v841
  %908 = vmatpush.msra.mxu0 %v840
  %909 = vmatpush.msra.mxu0 %v839
  %910 = vmatpush.msra.mxu0 %v838
  %911 = vmatmul.f32.gmra.mxu0 %v893
  %v912 = vpop.f32.mrf.mxu0
  %v913 = vadd.f32 %v844, %v912
  %914 = vdwg.mxu0
  %v915 = vtanh.pop %v867
  %v916 = vtanh.pop %v890
  %v917 = vtanh.pop %v913
  %v918 = vld [vmem:[%s53] sm:$0x1]
  %v920 = vperm.slane %v918, 0
  %v922 = vmul.f32 %v915, %v920
  %v923 = vmul.f32 %v916, %v920
  %v924 = vmul.f32 %v917, %v920
  %vm925 = vcmask 125952
  %v926 = vsel %vm925, %v922, 0.0
  %927 = vadd.xlane.f32.xlu0 %v926
  %v928 = vpop.xlane.xlu0 %927
  %v929 = vsel %vm925, %v923, 0.0
  %930 = vadd.xlane.f32.xlu0 %v929
  %v931 = vpop.xlane.xlu0 %930
  %v932 = vsel %vm925, %v924, 0.0
  %933 = vadd.xlane.f32.xlu0 %v932
  %v934 = vpop.xlane.xlu0 %933
  %v935 = vld [vmem:[#allocation6] sm:$0x1]
  %v937 = vperm.slane %v935, 0
  %938 = vset.pattern.permute.xlu0 0
  %939 = vperm.xlu0 %938, %v937
  %v940 = vpop.permute.xlu0 %939
  %v942 = vadd.f32 %v928, %v940
  %v943 = vadd.f32 %v931, %v940
  %v944 = vadd.f32 %v934, %v940
  %v948 = vperm.slane %v942, %v378
  %v949 = vperm.slane %v943, %v378
  %v950 = vperm.slane %v944, %v378
  %v951 = vsel %vm383, %v949, %v948
  %v952 = vsel %vm385, %v950, %v951
  %vm954 = vcmask 26624
  %955 = vst.msk [vmem:[%s63] sm:$0x7] %vm954, %v952
  // Predicated region
  $region114: #{_device_forward_impl.3} parent=0 // pred_check
    _
  $region115: #{_device_forward_impl.3} parent=0 // pred_check_branch
    %957 = sbr.rel (0) target = $region117
  $region116: #{_device_forward_impl.3} parent=0 // pred_region
    _
  $region117: #{_device_forward_impl.3} parent=0 // pred_fallthru
    _
  // Predicated region
  $region118: #{_device_forward_impl.3} parent=0 // pred_check
    _
  $region119: #{_device_forward_impl.3} parent=0 // pred_check_branch
    %959 = sbr.rel (0) target = $region121
  $region120: #{_device_forward_impl.3} parent=0 // pred_region
    _
  $region121: #{_device_forward_impl.3} parent=0 // pred_fallthru
    _
  // Predicated region
  $region122: #{_device_forward_impl.3} parent=0 // pred_check
    _
  $region123: #{_device_forward_impl.3} parent=0 // pred_check_branch
    %961 = sbr.rel (0) target = $region125
  $region124: #{_device_forward_impl.3} parent=0 // pred_region
    _
  $region125: #{_device_forward_impl.3} parent=0 // pred_fallthru
    _
  // Predicated region
  $region126: #{_device_forward_impl.3} parent=0 // pred_check
    _
  $region127: #{_device_forward_impl.3} parent=0 // pred_check_branch
    %963 = sbr.rel (0) target = $region129
  $region128: #{_device_forward_impl.3} parent=0 // pred_region
    _
  $region129: #{_device_forward_impl.3} parent=0 // pred_fallthru
    _
  // Predicated region
  $region130: #{_device_forward_impl.3} parent=0 // pred_check
    _
  $region131: #{_device_forward_impl.3} parent=0 // pred_check_branch
    %965 = sbr.rel (0) target = $region133
  $region132: #{_device_forward_impl.3} parent=0 // pred_region
    _
  $region133: #{_device_forward_impl.3} parent=0 // pred_fallthru
    _
  // Predicated region
  $region134: #{_device_forward_impl.3} parent=0 // pred_check
    _
  $region135: #{_device_forward_impl.3} parent=0 // pred_check_branch
    %967 = sbr.rel (0) target = $region137
  $region136: #{_device_forward_impl.3} parent=0 // pred_region
    _
  $region137: #{_device_forward_impl.3} parent=0 // pred_fallthru
    _
  // Predicated region
  $region138: #{_device_forward_impl.3} parent=0 // pred_check
    _
  $region139: #{_device_forward_impl.3} parent=0 // pred_check_branch
    %969 = sbr.rel (0) target = $region141
  $region140: #{_device_forward_impl.3} parent=0 // pred_region
    _
  $region141: #{_device_forward_impl.3} parent=0 // pred_fallthru
    _
  // Predicated region
  $region142: #{_device_forward_impl.3} parent=0 // pred_check
    _
  $region143: #{_device_forward_impl.3} parent=0 // pred_check_branch
    %971 = sbr.rel (0) target = $region145
  $region144: #{_device_forward_impl.3} parent=0 // pred_region
    _
  $region145: #{_device_forward_impl.3} parent=0 // pred_fallthru
    _

</llo_original>
